<compile_context>
chip_gen: v6e
topology: v6e:2x2x1
jax: 0.10.0
libtpu: 0.0.40
codegen_flags: <defaults>
</compile_context>

<pallas_src>
import math
from functools import partial

import jax
import jax.numpy as jnp
from jax.experimental import pallas as pl
from jax.experimental.pallas import tpu as pltpu

NEG_INF = -1.0e30          # Python float; never captured as a traced constant
LN_EPS = 1e-6


# ----------------------------------------------------------------------------
# Capability probe / per-generation planning
# ----------------------------------------------------------------------------
_SINGLE_BUFFER_OK = None


def _single_buffer_weights_supported():
    """Probe pl.Buffered(1) (single-buffered grid-invariant weight blocks).

    Halves the weight VMEM footprint (matters most on v7x's 64 MiB); falls
    back silently to default double-buffering if unsupported on this jax.
    """
    global _SINGLE_BUFFER_OK
    if _SINGLE_BUFFER_OK is not None:
        return _SINGLE_BUFFER_OK
    try:
        def k(x_ref, w_ref, o_ref):
            o_ref[...] = x_ref[...] + w_ref[...]

        x = jnp.zeros((16, 128), jnp.float32)
        w = jnp.ones((8, 128), jnp.float32)
        out = pl.pallas_call(
            k,
            out_shape=jax.ShapeDtypeStruct((16, 128), jnp.float32),
            grid=(2,),
            in_specs=[pl.BlockSpec((8, 128), lambda i: (i, 0)),
                      pl.BlockSpec((8, 128), lambda i: (0, 0),
                                   pipeline_mode=pl.Buffered(1))],
            out_specs=pl.BlockSpec((8, 128), lambda i: (i, 0)),
        )(x, w)
        jax.block_until_ready(out)
        ok = bool(jnp.all(out == x + 1.0))
    except Exception:
        ok = False
    _SINGLE_BUFFER_OK = ok
    return ok


def _vmem_capacity_bytes():
    try:
        return int(pltpu.get_tpu_info().vmem_capacity_bytes)
    except Exception:
        return 64 * 1024 * 1024            # conservative (v7x-sized) fallback


def _plan_layer_call(B, S, D, Hf, single_buffer):
    """Pick the batch tile TB (a divisor of B) and vmem_limit_bytes.

    Budgeted against the queried VMEM capacity with headroom, so a tile that
    fits v5e/v6e (128 MiB) is re-derived (not reused) on v7x (64 MiB).
    """
    cap = _vmem_capacity_bytes()
    vmem_limit = max(32 * 1024 * 1024, min(int(cap * 0.75), 96 * 1024 * 1024))

    wbuf = 1 if single_buffer else 2
    weight_bytes = wbuf * (2 * (3 * D * D + D * D + 2 * D * Hf)   # bf16 matrices
                           + 4 * (9 * D + Hf))                    # f32 biases/LN

    def fits(tb):
        r = tb * S
        io = 2 * (2 * r * D * 4 + 2 * r * 4)                 # x/out/masks, x2 bufs
        interm = int(1.5 * (3 * r * D * 4 + r * D * 2 + r * Hf * 4
                            + 3 * r * D * 4 + 2 * tb * S * S * 4))
        return weight_bytes + io + interm <= vmem_limit

    tb = 1
    for cand in range(1, B + 1):
        if B % cand != 0:
            continue
        if cand * S > 1024:        # diminishing returns past ~1024 rows / step
            break
        if fits(cand):
            tb = cand
    return tb, vmem_limit


# ----------------------------------------------------------------------------
# Parameter preparation (done once, outside the per-call path)
# ----------------------------------------------------------------------------
def prepare_layer_params(lp, num_heads):
    D = lp["wq"].shape[0]
    dh = D // num_heads
    scale = 1.0 / math.sqrt(dh)
    # Fuse Q|K|V and fold the attention scale into the Q columns.
    wqkv = jnp.concatenate([lp["wq"] * scale, lp["wk"], lp["wv"]], axis=1)
    bqkv = jnp.concatenate([lp["bq"] * scale, lp["bk"], lp["bv"]], axis=1)
    return {
        "wqkv": wqkv.astype(jnp.bfloat16),
        "bqkv": bqkv.astype(jnp.float32),
        "wo": lp["wo"].astype(jnp.bfloat16), "bo": lp["bo"],
        "ln1_g": lp["ln1_g"], "ln1_b": lp["ln1_b"],
        "w1": lp["w1"].astype(jnp.bfloat16), "b1": lp["b1"],
        "w2": lp["w2"].astype(jnp.bfloat16), "b2": lp["b2"],
        "ln2_g": lp["ln2_g"], "ln2_b": lp["ln2_b"],
    }


def prepare_encoder_params(weights, num_heads):
    return [prepare_layer_params(lp, num_heads) for lp in weights["layers"]]


# ----------------------------------------------------------------------------
# Fused encoder-layer kernel
# ----------------------------------------------------------------------------
def fused_layer_kernel(x_ref, bias_ref, mcol_ref,
                       wqkv_ref, bqkv_ref, wo_ref, bo_ref,
                       ln1g_ref, ln1b_ref, w1_ref, b1_ref, w2_ref, b2_ref,
                       ln2g_ref, ln2b_ref,
                       out_ref, ctx_ref, *, num_heads):
    tb, S, D = x_ref.shape
    H = num_heads
    dh = D // H
    R = tb * S

    x = x_ref[...].reshape(R, D)                    # f32 residual stream
    xb = x.astype(jnp.bfloat16)

    # Fused Q|K|V projection: one MXU stream, lane-dense 3D-wide result.
    qkv = jnp.dot(xb, wqkv_ref[...], preferred_element_type=jnp.float32)
    qkv = (qkv + bqkv_ref[...]).astype(jnp.bfloat16)   # scale folded into Q cols

    bias = bias_ref[...]                            # (tb, 1, S) additive key mask
    has_recip = hasattr(pl, "reciprocal")

    # Attention: static per-head loop (heads are static lane slices, batched
    # over the batch tile).  Per-head context is written lane-dense into the
    # VMEM scratch so the output projection below is one full-K MXU matmul.
    for h in range(H):
        qh = qkv[:, h * dh:(h + 1) * dh].reshape(tb, S, dh)
        kh = qkv[:, D + h * dh:D + (h + 1) * dh].reshape(tb, S, dh)
        vh = qkv[:, 2 * D + h * dh:2 * D + (h + 1) * dh].reshape(tb, S, dh)

        s = jnp.einsum("bqd,bkd->bqk", qh, kh,
                       preferred_element_type=jnp.float32)     # (tb, S, S)
        s = s + bias
        m = jnp.max(s, axis=-1, keepdims=True)
        e = jnp.exp(s - m)
        denom = jnp.sum(e, axis=-1, keepdims=True)
        if has_recip:
            w = e * pl.reciprocal(denom, approx=True)          # EUP slot
        else:
            w = e / denom
        w = w.astype(jnp.bfloat16)

        c = jnp.einsum("bqk,bkd->bqd", w, vh,
                       preferred_element_type=jnp.float32)     # (tb, S, dh)
        ctx_ref[:, h * dh:(h + 1) * dh] = c.astype(jnp.bfloat16).reshape(R, dh)

    # Output projection + residual + LayerNorm1.
    attn = jnp.dot(ctx_ref[...], wo_ref[...],
                   preferred_element_type=jnp.float32) + bo_ref[...]
    t = x + attn
    mu = jnp.mean(t, axis=-1, keepdims=True)
    var = jnp.mean((t - mu) ** 2, axis=-1, keepdims=True)
    t = (t - mu) * jax.lax.rsqrt(var + LN_EPS) * ln1g_ref[...] + ln1b_ref[...]

    # FFN (ReLU) + residual + LayerNorm2.
    h1 = jnp.dot(t.astype(jnp.bfloat16), w1_ref[...],
                 preferred_element_type=jnp.float32) + b1_ref[...]
    h1 = jnp.maximum(h1, 0.0)
    ffn = jnp.dot(h1.astype(jnp.bfloat16), w2_ref[...],
                  preferred_element_type=jnp.float32) + b2_ref[...]
    t2 = t + ffn
    mu2 = jnp.mean(t2, axis=-1, keepdims=True)
    var2 = jnp.mean((t2 - mu2) ** 2, axis=-1, keepdims=True)
    t2 = (t2 - mu2) * jax.lax.rsqrt(var2 + LN_EPS) * ln2g_ref[...] + ln2b_ref[...]

    out = t2 * mcol_ref[...].reshape(R, 1)          # sequence mask
    out_ref[...] = out.reshape(tb, S, D)


def encoder_layer_pallas(x, mask_bias, mask_col, pp, num_heads, *,
                         tb, vmem_limit, single_buffer):
    B, S, D = x.shape
    Hf = pp["w1"].shape[1]
    H = num_heads
    dh = D // H

    x_spec = pl.BlockSpec((tb, S, D), lambda b: (b, 0, 0))
    bias_spec = pl.BlockSpec((tb, 1, S), lambda b: (b, 0, 0))
    mcol_spec = pl.BlockSpec((tb, S, 1), lambda b: (b, 0, 0))

    def wspec(shape):
        idx = lambda b, n=len(shape): (0,) * n
        if single_buffer:
            return pl.BlockSpec(shape, idx, pipeline_mode=pl.Buffered(1))
        return pl.BlockSpec(shape, idx)

    flops = 2 * B * S * D * (4 * D + 2 * Hf) + 4 * B * H * S * S * dh
    transcendentals = B * H * S * S + 2 * B * S
    bytes_accessed = (8 * B * S * D + 8 * B * S
                      + 2 * (4 * D * D + 2 * D * Hf) + 4 * (9 * D + Hf))

    fn = pl.pallas_call(
        partial(fused_layer_kernel, num_heads=H),
        out_shape=jax.ShapeDtypeStruct((B, S, D), jnp.float32),
        grid_spec=pltpu.PrefetchScalarGridSpec(
            num_scalar_prefetch=0,
            grid=(B // tb,),
            in_specs=[x_spec, bias_spec, mcol_spec,
                      wspec((D, 3 * D)), wspec((1, 3 * D)),
                      wspec((D, D)), wspec((1, D)),
                      wspec((1, D)), wspec((1, D)),
                      wspec((D, Hf)), wspec((1, Hf)),
                      wspec((Hf, D)), wspec((1, D)),
                      wspec((1, D)), wspec((1, D))],
            out_specs=x_spec,
            scratch_shapes=[pltpu.VMEM((tb * S, D), jnp.bfloat16)],
        ),
        compiler_params=pltpu.CompilerParams(
            dimension_semantics=("parallel",),
            vmem_limit_bytes=vmem_limit),
        cost_estimate=pl.CostEstimate(flops=flops,
                                      transcendentals=transcendentals,
                                      bytes_accessed=bytes_accessed),
    )
    return fn(x, mask_bias, mask_col,
              pp["wqkv"], pp["bqkv"], pp["wo"], pp["bo"],
              pp["ln1_g"], pp["ln1_b"], pp["w1"], pp["b1"], pp["w2"], pp["b2"],
              pp["ln2_g"], pp["ln2_b"])


# ----------------------------------------------------------------------------
# Glue (embedding lookup, timing signal, masks) — plain JAX
# ----------------------------------------------------------------------------
def timing_signal(slen, channels, min_timescale=1.0, max_timescale=1.0e4):
    position = jnp.arange(slen, dtype=jnp.float32)
    num_timescales = channels // 2
    log_inc = math.log(max_timescale / min_timescale) / max(num_timescales - 1, 1)
    inv_timescales = min_timescale * jnp.exp(
        jnp.arange(num_timescales, dtype=jnp.float32) * -log_inc)
    scaled_time = position[:, None] * inv_timescales[None, :]
    signal = jnp.concatenate([jnp.sin(scaled_time), jnp.cos(scaled_time)], axis=1)
    if channels % 2:
        signal = jnp.pad(signal, ((0, 0), (0, channels % 2)))
    return signal  # (S, D)


def table_encoder_forward(weights, x1, x2, x3, x4, lengths, num_heads,
                          use_pallas=True, prepared_layers=None):
    bs, slen = x1.shape
    emb = weights["embedding"]
    embs = [jnp.take(emb, xi, axis=0) for xi in (x1, x2, x3, x4)]
    tensor = jnp.concatenate(embs, axis=-1)                      # (B, S, D)
    dim = tensor.shape[-1]
    tensor = tensor * math.sqrt(dim) + weights["bias"][None, None, :]
    tensor = tensor + timing_signal(slen, dim)[None, :, :]
    # get_masks(slen, lengths, causal=False): key-padding mask
    mask = (jnp.arange(slen)[None, :] < lengths[:, None]).astype(jnp.float32)
    tensor = tensor * mask[:, :, None]
    # residual / attention / relu dropout: identity at inference

    if not use_pallas:
        for lp in weights["layers"]:
            tensor = encoder_layer_ref(tensor, mask, lp, num_heads)
        return tensor

    if prepared_layers is None:
        prepared_layers = prepare_encoder_params(weights, num_heads)
    hidden = weights["layers"][0]["w1"].shape[1]
    # Layer-invariant quantities, hoisted out of the layer loop.
    mask_bias = ((1.0 - mask) * NEG_INF)[:, None, :]             # (B, 1, S)
    mask_col = mask[:, :, None]                                  # (B, S, 1)
    single_buffer = _single_buffer_weights_supported()
    tb, vmem_limit = _plan_layer_call(bs, slen, dim, hidden, single_buffer)
    # TODO(synk): P10 cross-call prefetch of layer l+1 weights inside layer l.
    for pp in prepared_layers:
        tensor = encoder_layer_pallas(tensor, mask_bias, mask_col, pp,
                                      num_heads, tb=tb, vmem_limit=vmem_limit,
                                      single_buffer=single_buffer)
    return tensor


# ----------------------------------------------------------------------------
# Pure-JAX reference layer (mirrors the bf16-matmul / f32-accumulate policy)
# ----------------------------------------------------------------------------
def encoder_layer_ref(x, mask, lp, num_heads):
    B, S, D = x.shape
    H, dh = num_heads, D // num_heads
    scale = 1.0 / math.sqrt(dh)
    R = B * S
    x_flat = x.reshape(R, D)
    xb = x_flat.astype(jnp.bfloat16)
    bf16 = lambda w: w.astype(jnp.bfloat16)

    def proj(w, b):
        return (jnp.dot(xb, bf16(w), preferred_element_type=jnp.float32)
                + b).astype(jnp.bfloat16)

    q = proj(lp["wq"], lp["bq"])
    k = proj(lp["wk"], lp["bk"])
    v = proj(lp["wv"], lp["bv"])
    heads = lambda t: t.reshape(B, S, H, dh).transpose(0, 2, 1, 3)
    qh, kh, vh = heads(q), heads(k), heads(v)

    s = jnp.einsum("bhqd,bhkd->bhqk", qh, kh, preferred_element_type=jnp.float32)
    s = s * scale + ((1.0 - mask) * NEG_INF)[:, None, None, :]
    m = jnp.max(s, axis=-1, keepdims=True)
    e = jnp.exp(s - m)
    w = (e / jnp.sum(e, axis=-1, keepdims=True)).astype(jnp.bfloat16)
    ctx = jnp.einsum("bhqk,bhkd->bhqd", w, vh,
                     preferred_element_type=jnp.float32).astype(jnp.bfloat16)
    ctx_flat = ctx.transpose(0, 2, 1, 3).reshape(R, D)

    def ln(t, g, b):
        mu = jnp.mean(t, axis=-1, keepdims=True)
        var = jnp.mean((t - mu) ** 2, axis=-1, keepdims=True)
        return (t - mu) * jax.lax.rsqrt(var + LN_EPS) * g + b

    attn = jnp.dot(ctx_flat, bf16(lp["wo"]),
                   preferred_element_type=jnp.float32) + lp["bo"]
    t = ln(x_flat + attn, lp["ln1_g"], lp["ln1_b"])
    h1 = jnp.maximum(jnp.dot(t.astype(jnp.bfloat16), bf16(lp["w1"]),
                             preferred_element_type=jnp.float32) + lp["b1"], 0.0)
    ffn = jnp.dot(h1.astype(jnp.bfloat16), bf16(lp["w2"]),
                  preferred_element_type=jnp.float32) + lp["b2"]
    t2 = ln(t + ffn, lp["ln2_g"], lp["ln2_b"])
    return (t2 * mask.reshape(R, 1)).reshape(B, S, D)


# ----------------------------------------------------------------------------
# Deterministic synthetic parameters
# ----------------------------------------------------------------------------
def init_weights(key, vocab, dim, hidden, n_layers):
    emb_dim = dim // 4
    k_emb, k_bias, k_layers = jax.random.split(key, 3)
    w = {
        "embedding": 0.1 * jax.random.normal(k_emb, (vocab, emb_dim), jnp.float32),
        "bias": 0.02 * jax.random.normal(k_bias, (dim,), jnp.float32),
        "layers": [],
    }
    s = 0.08
    for lk in jax.random.split(k_layers, n_layers):
        ks = jax.random.split(lk, 14)
        lp = {
            "wq": s * jax.random.normal(ks[0], (dim, dim), jnp.float32),
            "bq": s * jax.random.normal(ks[1], (1, dim), jnp.float32),
            "wk": s * jax.random.normal(ks[2], (dim, dim), jnp.float32),
            "bk": s * jax.random.normal(ks[3], (1, dim), jnp.float32),
            "wv": s * jax.random.normal(ks[4], (dim, dim), jnp.float32),
            "bv": s * jax.random.normal(ks[5], (1, dim), jnp.float32),
            "wo": s * jax.random.normal(ks[6], (dim, dim), jnp.float32),
            "bo": s * jax.random.normal(ks[7], (1, dim), jnp.float32),
            "ln1_g": 1.0 + 0.05 * jax.random.normal(ks[8], (1, dim), jnp.float32),
            "ln1_b": 0.05 * jax.random.normal(ks[9], (1, dim), jnp.float32),
            "w1": s * jax.random.normal(ks[10], (dim, hidden), jnp.float32),
            "b1": s * jax.random.normal(ks[11], (1, hidden), jnp.float32),
            "w2": s * jax.random.normal(ks[12], (hidden, dim), jnp.float32),
            "b2": s * jax.random.normal(ks[13], (1, dim), jnp.float32),
            "ln2_g": jnp.ones((1, dim), jnp.float32),
            "ln2_b": jnp.zeros((1, dim), jnp.float32),
        }
        w["layers"].append(lp)
    return w


if __name__ == "__main__":
    VOCAB, DIM, HIDDEN, HEADS, LAYERS = 53, 32, 64, 4, 2
    BS, SLEN = 2, 8

    key = jax.random.PRNGKey(0)
    kw, k1, k2, k3, k4 = jax.random.split(key, 5)
    weights = init_weights(kw, VOCAB, DIM, HIDDEN, LAYERS)

    x1 = jax.random.randint(k1, (BS, SLEN), 0, VOCAB, dtype=jnp.int32)
    x2 = jax.random.randint(k2, (BS, SLEN), 0, VOCAB, dtype=jnp.int32)
    x3 = jax.random.randint(k3, (BS, SLEN), 0, VOCAB, dtype=jnp.int32)
    x4 = jax.random.randint(k4, (BS, SLEN), 0, VOCAB, dtype=jnp.int32)
    lengths = jnp.array([SLEN, 5], dtype=jnp.int32)

    # Weight prep (bf16 cast, QKV fusion, scale folding) hoisted out of the
    # forward; done once.
    prepared = prepare_encoder_params(weights, HEADS)

    out = table_encoder_forward(weights, x1, x2, x3, x4, lengths, HEADS,
                                use_pallas=True, prepared_layers=prepared)
    out = jax.block_until_ready(out)

    ref = table_encoder_forward(weights, x1, x2, x3, x4, lengths, HEADS,
                                use_pallas=False)
    ref = jax.block_until_ready(ref)

    assert out.shape == (BS, SLEN, DIM), out.shape
    max_err = float(jnp.max(jnp.abs(out.astype(jnp.float32) - ref.astype(jnp.float32))))
    assert max_err < 2e-2, f"max abs error vs reference: {max_err}"
    print("KERNEL_OK")
</pallas_src>

<mosaic_0001>
module attributes {stable_mosaic.version = 11 : i64} {
  func.func @k(%arg0: i32, %arg1: memref<8x128xf32, #tpu.memory_space<vmem>>, %arg2: memref<8x128xf32, #tpu.memory_space<vmem>>, %arg3: memref<8x128xf32, #tpu.memory_space<vmem>>) attributes {dimension_semantics = [#tpu.dimension_semantics<arbitrary>], iteration_bounds = array<i64: 2>, scalar_prefetch = 0 : i64, scratch_operands = 0 : i64, tpu.core_type = #tpu.core_type<tc>, window_params = [{transform_indices = @transform_0, window_bounds = array<i64: 8, 128>}, {pipeline_mode = #tpu.pipeline_mode<synchronous>, transform_indices = @transform_1, window_bounds = array<i64: 8, 128>}, {transform_indices = @transform_2, window_bounds = array<i64: 8, 128>}]} {
    %c0 = arith.constant 0 : index
    %c0_0 = arith.constant 0 : index
    %0 = vector.load %arg1[%c0, %c0_0] : memref<8x128xf32, #tpu.memory_space<vmem>>, vector<8x128xf32>
    %c0_1 = arith.constant 0 : index
    %c0_2 = arith.constant 0 : index
    %1 = vector.load %arg2[%c0_1, %c0_2] : memref<8x128xf32, #tpu.memory_space<vmem>>, vector<8x128xf32>
    %2 = arith.addf %0, %1 : vector<8x128xf32>
    %c0_3 = arith.constant 0 : index
    %c0_4 = arith.constant 0 : index
    %3 = vector.load %arg3[%c0_3, %c0_4] : memref<8x128xf32, #tpu.memory_space<vmem>>, vector<8x128xf32>
    tpu.vector_store %arg3[%c0_3, %c0_4], %2 {strides = array<i32>} : memref<8x128xf32, #tpu.memory_space<vmem>>, vector<8x128xf32>,
    return
  }
  func.func @transform_0(%arg0: i32) -> (i32, i32) {
    %c0_i32 = arith.constant 0 : i32
    %c0_i32_0 = arith.constant 0 : i32
    return %arg0, %c0_i32 : i32, i32
  }
  func.func @transform_1(%arg0: i32) -> (i32, i32) {
    %c0_i32 = arith.constant 0 : i32
    %c0_i32_0 = arith.constant 0 : i32
    %c0_i32_1 = arith.constant 0 : i32
    return %c0_i32, %c0_i32_0 : i32, i32
  }
  func.func @transform_2(%arg0: i32) -> (i32, i32) {
    %c0_i32 = arith.constant 0 : i32
    %c0_i32_0 = arith.constant 0 : i32
    return %arg0, %c0_i32 : i32, i32
  }
}

module attributes {stable_mosaic.version = 11 : i64} {
  func.func @fused_layer_kernel(%arg0: i32, %arg1: memref<2x8x32xf32, #tpu.memory_space<vmem>>, %arg2: memref<2x1x8xf32, #tpu.memory_space<vmem>>, %arg3: memref<2x8x1xf32, #tpu.memory_space<vmem>>, %arg4: memref<32x96xbf16, #tpu.memory_space<vmem>>, %arg5: memref<1x96xf32, #tpu.memory_space<vmem>>, %arg6: memref<32x32xbf16, #tpu.memory_space<vmem>>, %arg7: memref<1x32xf32, #tpu.memory_space<vmem>>, %arg8: memref<1x32xf32, #tpu.memory_space<vmem>>, %arg9: memref<1x32xf32, #tpu.memory_space<vmem>>, %arg10: memref<32x64xbf16, #tpu.memory_space<vmem>>, %arg11: memref<1x64xf32, #tpu.memory_space<vmem>>, %arg12: memref<64x32xbf16, #tpu.memory_space<vmem>>, %arg13: memref<1x32xf32, #tpu.memory_space<vmem>>, %arg14: memref<1x32xf32, #tpu.memory_space<vmem>>, %arg15: memref<1x32xf32, #tpu.memory_space<vmem>>, %arg16: memref<2x8x32xf32, #tpu.memory_space<vmem>>, %arg17: memref<16x32xbf16, #tpu.memory_space<vmem>>) attributes {dimension_semantics = [#tpu.dimension_semantics<parallel>], iteration_bounds = array<i64: 1>, scalar_prefetch = 0 : i64, scratch_operands = 1 : i64, tpu.core_type = #tpu.core_type<tc>, window_params = [{transform_indices = @transform_0, window_bounds = array<i64: 2, 8, 32>}, {transform_indices = @transform_1, window_bounds = array<i64: 2, 1, 8>}, {transform_indices = @transform_2, window_bounds = array<i64: 2, 8, 1>}, {pipeline_mode = #tpu.pipeline_mode<synchronous>, transform_indices = @transform_3, window_bounds = array<i64: 32, 96>}, {pipeline_mode = #tpu.pipeline_mode<synchronous>, transform_indices = @transform_4, window_bounds = array<i64: 1, 96>}, {pipeline_mode = #tpu.pipeline_mode<synchronous>, transform_indices = @transform_5, window_bounds = array<i64: 32, 32>}, {pipeline_mode = #tpu.pipeline_mode<synchronous>, transform_indices = @transform_6, window_bounds = array<i64: 1, 32>}, {pipeline_mode = #tpu.pipeline_mode<synchronous>, transform_indices = @transform_7, window_bounds = array<i64: 1, 32>}, {pipeline_mode = #tpu.pipeline_mode<synchronous>, transform_indices = @transform_8, window_bounds = array<i64: 1, 32>}, {pipeline_mode = #tpu.pipeline_mode<synchronous>, transform_indices = @transform_9, window_bounds = array<i64: 32, 64>}, {pipeline_mode = #tpu.pipeline_mode<synchronous>, transform_indices = @transform_10, window_bounds = array<i64: 1, 64>}, {pipeline_mode = #tpu.pipeline_mode<synchronous>, transform_indices = @transform_11, window_bounds = array<i64: 64, 32>}, {pipeline_mode = #tpu.pipeline_mode<synchronous>, transform_indices = @transform_12, window_bounds = array<i64: 1, 32>}, {pipeline_mode = #tpu.pipeline_mode<synchronous>, transform_indices = @transform_13, window_bounds = array<i64: 1, 32>}, {pipeline_mode = #tpu.pipeline_mode<synchronous>, transform_indices = @transform_14, window_bounds = array<i64: 1, 32>}, {transform_indices = @transform_15, window_bounds = array<i64: 2, 8, 32>}]} {
    %c0 = arith.constant 0 : index
    %c0_0 = arith.constant 0 : index
    %c0_1 = arith.constant 0 : index
    %0 = vector.load %arg1[%c0, %c0_0, %c0_1] : memref<2x8x32xf32, #tpu.memory_space<vmem>>, vector<2x8x32xf32>
    %1 = vector.shape_cast %0 : vector<2x8x32xf32> to vector<16x32xf32>
    %2 = arith.truncf %1 : vector<16x32xf32> to vector<16x32xbf16>
    %c0_2 = arith.constant 0 : index
    %c0_3 = arith.constant 0 : index
    %3 = vector.load %arg4[%c0_2, %c0_3] : memref<32x96xbf16, #tpu.memory_space<vmem>>, vector<32x96xbf16>
    %cst = arith.constant dense<0.000000e+00> : vector<16x96xf32>
    %4 = tpu.matmul %2, %3, %cst {dimension_numbers = #tpu.dot_dimension_numbers<[1], [0], [0], [1], [0, 0, 1, 1], [], []>} : vector<16x32xbf16>, vector<32x96xbf16>, vector<16x96xf32> -> vector<16x96xf32>
    %c0_4 = arith.constant 0 : index
    %c0_5 = arith.constant 0 : index
    %5 = vector.load %arg5[%c0_4, %c0_5] : memref<1x96xf32, #tpu.memory_space<vmem>>, vector<1x96xf32>
    %6 = vector.broadcast %5 : vector<1x96xf32> to vector<16x96xf32>
    %7 = arith.addf %4, %6 : vector<16x96xf32>
    %8 = arith.truncf %7 : vector<16x96xf32> to vector<16x96xbf16>
    %c0_6 = arith.constant 0 : index
    %c0_7 = arith.constant 0 : index
    %c0_8 = arith.constant 0 : index
    %9 = vector.load %arg2[%c0_6, %c0_7, %c0_8] : memref<2x1x8xf32, #tpu.memory_space<vmem>>, vector<2x1x8xf32>
    %10 = vector.extract_strided_slice %8 {offsets = [0, 0], sizes = [16, 8], strides = [1, 1]} : vector<16x96xbf16> to vector<16x8xbf16>
    %11 = vector.shape_cast %10 : vector<16x8xbf16> to vector<2x8x8xbf16>
    %12 = vector.extract_strided_slice %8 {offsets = [0, 32], sizes = [16, 8], strides = [1, 1]} : vector<16x96xbf16> to vector<16x8xbf16>
    %13 = vector.shape_cast %12 : vector<16x8xbf16> to vector<2x8x8xbf16>
    %14 = vector.extract_strided_slice %8 {offsets = [0, 64], sizes = [16, 8], strides = [1, 1]} : vector<16x96xbf16> to vector<16x8xbf16>
    %15 = vector.shape_cast %14 : vector<16x8xbf16> to vector<2x8x8xbf16>
    "tpu.trace_start"() <{level = 10 : i32, message = "bqd,bkd->bqk"}> : () -> ()
    %cst_9 = arith.constant dense<0.000000e+00> : vector<2x8x8xf32>
    %16 = tpu.matmul %11, %13, %cst_9 {dimension_numbers = #tpu.dot_dimension_numbers<[2], [2], [1], [1], [0, 0, 0, 1, 1, 1], [0], [0]>} : vector<2x8x8xbf16>, vector<2x8x8xbf16>, vector<2x8x8xf32> -> vector<2x8x8xf32>
    "tpu.trace_stop"() : () -> ()
    %17 = vector.broadcast %9 : vector<2x1x8xf32> to vector<2x8x8xf32>
    %18 = arith.addf %16, %17 : vector<2x8x8xf32>
    %cst_10 = arith.constant dense<0xFF800000> : vector<2x8xf32>
    %19 = vector.multi_reduction <maximumf>, %18, %cst_10 [2] : vector<2x8x8xf32> to vector<2x8xf32>
    %20 = vector.shape_cast %19 : vector<2x8xf32> to vector<2x8x1xf32>
    %21 = vector.broadcast %20 : vector<2x8x1xf32> to vector<2x8x8xf32>
    %22 = arith.subf %18, %21 : vector<2x8x8xf32>
    %23 = math.exp %22 : vector<2x8x8xf32>
    %cst_11 = arith.constant dense<0.000000e+00> : vector<2x8xf32>
    %24 = vector.multi_reduction <add>, %23, %cst_11 [2] : vector<2x8x8xf32> to vector<2x8xf32>
    %25 = vector.shape_cast %24 : vector<2x8xf32> to vector<2x8x1xf32>
    %26 = tpu.reciprocal %25 {approx = true} : vector<2x8x1xf32> -> vector<2x8x1xf32>
    %27 = vector.broadcast %26 : vector<2x8x1xf32> to vector<2x8x8xf32>
    %28 = arith.mulf %23, %27 : vector<2x8x8xf32>
    %29 = arith.truncf %28 : vector<2x8x8xf32> to vector<2x8x8xbf16>
    "tpu.trace_start"() <{level = 10 : i32, message = "bqk,bkd->bqd"}> : () -> ()
    %cst_12 = arith.constant dense<0.000000e+00> : vector<2x8x8xf32>
    %30 = tpu.matmul %29, %15, %cst_12 {dimension_numbers = #tpu.dot_dimension_numbers<[2], [1], [1], [2], [0, 0, 0, 1, 1, 2], [0], [0]>} : vector<2x8x8xbf16>, vector<2x8x8xbf16>, vector<2x8x8xf32> -> vector<2x8x8xf32>
    "tpu.trace_stop"() : () -> ()
    %31 = arith.truncf %30 : vector<2x8x8xf32> to vector<2x8x8xbf16>
    %32 = vector.shape_cast %31 : vector<2x8x8xbf16> to vector<16x8xbf16>
    %c0_13 = arith.constant 0 : index
    %c0_14 = arith.constant 0 : index
    %33 = vector.load %arg17[%c0_13, %c0_14] : memref<16x32xbf16, #tpu.memory_space<vmem>>, vector<16x8xbf16>
    tpu.vector_store %arg17[%c0_13, %c0_14], %32 {strides = array<i32>} : memref<16x32xbf16, #tpu.memory_space<vmem>>, vector<16x8xbf16>,
    %34 = vector.extract_strided_slice %8 {offsets = [0, 8], sizes = [16, 8], strides = [1, 1]} : vector<16x96xbf16> to vector<16x8xbf16>
    %35 = vector.shape_cast %34 : vector<16x8xbf16> to vector<2x8x8xbf16>
    %36 = vector.extract_strided_slice %8 {offsets = [0, 40], sizes = [16, 8], strides = [1, 1]} : vector<16x96xbf16> to vector<16x8xbf16>
    %37 = vector.shape_cast %36 : vector<16x8xbf16> to vector<2x8x8xbf16>
    %38 = vector.extract_strided_slice %8 {offsets = [0, 72], sizes = [16, 8], strides = [1, 1]} : vector<16x96xbf16> to vector<16x8xbf16>
    %39 = vector.shape_cast %38 : vector<16x8xbf16> to vector<2x8x8xbf16>
    "tpu.trace_start"() <{level = 10 : i32, message = "bqd,bkd->bqk"}> : () -> ()
    %cst_15 = arith.constant dense<0.000000e+00> : vector<2x8x8xf32>
    %40 = tpu.matmul %35, %37, %cst_15 {dimension_numbers = #tpu.dot_dimension_numbers<[2], [2], [1], [1], [0, 0, 0, 1, 1, 1], [0], [0]>} : vector<2x8x8xbf16>, vector<2x8x8xbf16>, vector<2x8x8xf32> -> vector<2x8x8xf32>
    "tpu.trace_stop"() : () -> ()
    %41 = vector.broadcast %9 : vector<2x1x8xf32> to vector<2x8x8xf32>
    %42 = arith.addf %40, %41 : vector<2x8x8xf32>
    %cst_16 = arith.constant dense<0xFF800000> : vector<2x8xf32>
    %43 = vector.multi_reduction <maximumf>, %42, %cst_16 [2] : vector<2x8x8xf32> to vector<2x8xf32>
    %44 = vector.shape_cast %43 : vector<2x8xf32> to vector<2x8x1xf32>
    %45 = vector.broadcast %44 : vector<2x8x1xf32> to vector<2x8x8xf32>
    %46 = arith.subf %42, %45 : vector<2x8x8xf32>
    %47 = math.exp %46 : vector<2x8x8xf32>
    %cst_17 = arith.constant dense<0.000000e+00> : vector<2x8xf32>
    %48 = vector.multi_reduction <add>, %47, %cst_17 [2] : vector<2x8x8xf32> to vector<2x8xf32>
    %49 = vector.shape_cast %48 : vector<2x8xf32> to vector<2x8x1xf32>
    %50 = tpu.reciprocal %49 {approx = true} : vector<2x8x1xf32> -> vector<2x8x1xf32>
    %51 = vector.broadcast %50 : vector<2x8x1xf32> to vector<2x8x8xf32>
    %52 = arith.mulf %47, %51 : vector<2x8x8xf32>
    %53 = arith.truncf %52 : vector<2x8x8xf32> to vector<2x8x8xbf16>
    "tpu.trace_start"() <{level = 10 : i32, message = "bqk,bkd->bqd"}> : () -> ()
    %cst_18 = arith.constant dense<0.000000e+00> : vector<2x8x8xf32>
    %54 = tpu.matmul %53, %39, %cst_18 {dimension_numbers = #tpu.dot_dimension_numbers<[2], [1], [1], [2], [0, 0, 0, 1, 1, 2], [0], [0]>} : vector<2x8x8xbf16>, vector<2x8x8xbf16>, vector<2x8x8xf32> -> vector<2x8x8xf32>
    "tpu.trace_stop"() : () -> ()
    %55 = arith.truncf %54 : vector<2x8x8xf32> to vector<2x8x8xbf16>
    %56 = vector.shape_cast %55 : vector<2x8x8xbf16> to vector<16x8xbf16>
    %c0_19 = arith.constant 0 : index
    %c8 = arith.constant 8 : index
    %57 = vector.load %arg17[%c0_19, %c8] : memref<16x32xbf16, #tpu.memory_space<vmem>>, vector<16x8xbf16>
    tpu.vector_store %arg17[%c0_19, %c8], %56 {strides = array<i32>} : memref<16x32xbf16, #tpu.memory_space<vmem>>, vector<16x8xbf16>,
    %58 = vector.extract_strided_slice %8 {offsets = [0, 16], sizes = [16, 8], strides = [1, 1]} : vector<16x96xbf16> to vector<16x8xbf16>
    %59 = vector.shape_cast %58 : vector<16x8xbf16> to vector<2x8x8xbf16>
    %60 = vector.extract_strided_slice %8 {offsets = [0, 48], sizes = [16, 8], strides = [1, 1]} : vector<16x96xbf16> to vector<16x8xbf16>
    %61 = vector.shape_cast %60 : vector<16x8xbf16> to vector<2x8x8xbf16>
    %62 = vector.extract_strided_slice %8 {offsets = [0, 80], sizes = [16, 8], strides = [1, 1]} : vector<16x96xbf16> to vector<16x8xbf16>
    %63 = vector.shape_cast %62 : vector<16x8xbf16> to vector<2x8x8xbf16>
    "tpu.trace_start"() <{level = 10 : i32, message = "bqd,bkd->bqk"}> : () -> ()
    %cst_20 = arith.constant dense<0.000000e+00> : vector<2x8x8xf32>
    %64 = tpu.matmul %59, %61, %cst_20 {dimension_numbers = #tpu.dot_dimension_numbers<[2], [2], [1], [1], [0, 0, 0, 1, 1, 1], [0], [0]>} : vector<2x8x8xbf16>, vector<2x8x8xbf16>, vector<2x8x8xf32> -> vector<2x8x8xf32>
    "tpu.trace_stop"() : () -> ()
    %65 = vector.broadcast %9 : vector<2x1x8xf32> to vector<2x8x8xf32>
    %66 = arith.addf %64, %65 : vector<2x8x8xf32>
    %cst_21 = arith.constant dense<0xFF800000> : vector<2x8xf32>
    %67 = vector.multi_reduction <maximumf>, %66, %cst_21 [2] : vector<2x8x8xf32> to vector<2x8xf32>
    %68 = vector.shape_cast %67 : vector<2x8xf32> to vector<2x8x1xf32>
    %69 = vector.broadcast %68 : vector<2x8x1xf32> to vector<2x8x8xf32>
    %70 = arith.subf %66, %69 : vector<2x8x8xf32>
    %71 = math.exp %70 : vector<2x8x8xf32>
    %cst_22 = arith.constant dense<0.000000e+00> : vector<2x8xf32>
    %72 = vector.multi_reduction <add>, %71, %cst_22 [2] : vector<2x8x8xf32> to vector<2x8xf32>
    %73 = vector.shape_cast %72 : vector<2x8xf32> to vector<2x8x1xf32>
    %74 = tpu.reciprocal %73 {approx = true} : vector<2x8x1xf32> -> vector<2x8x1xf32>
    %75 = vector.broadcast %74 : vector<2x8x1xf32> to vector<2x8x8xf32>
    %76 = arith.mulf %71, %75 : vector<2x8x8xf32>
    %77 = arith.truncf %76 : vector<2x8x8xf32> to vector<2x8x8xbf16>
    "tpu.trace_start"() <{level = 10 : i32, message = "bqk,bkd->bqd"}> : () -> ()
    %cst_23 = arith.constant dense<0.000000e+00> : vector<2x8x8xf32>
    %78 = tpu.matmul %77, %63, %cst_23 {dimension_numbers = #tpu.dot_dimension_numbers<[2], [1], [1], [2], [0, 0, 0, 1, 1, 2], [0], [0]>} : vector<2x8x8xbf16>, vector<2x8x8xbf16>, vector<2x8x8xf32> -> vector<2x8x8xf32>
    "tpu.trace_stop"() : () -> ()
    %79 = arith.truncf %78 : vector<2x8x8xf32> to vector<2x8x8xbf16>
    %80 = vector.shape_cast %79 : vector<2x8x8xbf16> to vector<16x8xbf16>
    %c0_24 = arith.constant 0 : index
    %c16 = arith.constant 16 : index
    %81 = vector.load %arg17[%c0_24, %c16] : memref<16x32xbf16, #tpu.memory_space<vmem>>, vector<16x8xbf16>
    tpu.vector_store %arg17[%c0_24, %c16], %80 {strides = array<i32>} : memref<16x32xbf16, #tpu.memory_space<vmem>>, vector<16x8xbf16>,
    %82 = vector.extract_strided_slice %8 {offsets = [0, 24], sizes = [16, 8], strides = [1, 1]} : vector<16x96xbf16> to vector<16x8xbf16>
    %83 = vector.shape_cast %82 : vector<16x8xbf16> to vector<2x8x8xbf16>
    %84 = vector.extract_strided_slice %8 {offsets = [0, 56], sizes = [16, 8], strides = [1, 1]} : vector<16x96xbf16> to vector<16x8xbf16>
    %85 = vector.shape_cast %84 : vector<16x8xbf16> to vector<2x8x8xbf16>
    %86 = vector.extract_strided_slice %8 {offsets = [0, 88], sizes = [16, 8], strides = [1, 1]} : vector<16x96xbf16> to vector<16x8xbf16>
    %87 = vector.shape_cast %86 : vector<16x8xbf16> to vector<2x8x8xbf16>
    "tpu.trace_start"() <{level = 10 : i32, message = "bqd,bkd->bqk"}> : () -> ()
    %cst_25 = arith.constant dense<0.000000e+00> : vector<2x8x8xf32>
    %88 = tpu.matmul %83, %85, %cst_25 {dimension_numbers = #tpu.dot_dimension_numbers<[2], [2], [1], [1], [0, 0, 0, 1, 1, 1], [0], [0]>} : vector<2x8x8xbf16>, vector<2x8x8xbf16>, vector<2x8x8xf32> -> vector<2x8x8xf32>
    "tpu.trace_stop"() : () -> ()
    %89 = vector.broadcast %9 : vector<2x1x8xf32> to vector<2x8x8xf32>
    %90 = arith.addf %88, %89 : vector<2x8x8xf32>
    %cst_26 = arith.constant dense<0xFF800000> : vector<2x8xf32>
    %91 = vector.multi_reduction <maximumf>, %90, %cst_26 [2] : vector<2x8x8xf32> to vector<2x8xf32>
    %92 = vector.shape_cast %91 : vector<2x8xf32> to vector<2x8x1xf32>
    %93 = vector.broadcast %92 : vector<2x8x1xf32> to vector<2x8x8xf32>
    %94 = arith.subf %90, %93 : vector<2x8x8xf32>
    %95 = math.exp %94 : vector<2x8x8xf32>
    %cst_27 = arith.constant dense<0.000000e+00> : vector<2x8xf32>
    %96 = vector.multi_reduction <add>, %95, %cst_27 [2] : vector<2x8x8xf32> to vector<2x8xf32>
    %97 = vector.shape_cast %96 : vector<2x8xf32> to vector<2x8x1xf32>
    %98 = tpu.reciprocal %97 {approx = true} : vector<2x8x1xf32> -> vector<2x8x1xf32>
    %99 = vector.broadcast %98 : vector<2x8x1xf32> to vector<2x8x8xf32>
    %100 = arith.mulf %95, %99 : vector<2x8x8xf32>
    %101 = arith.truncf %100 : vector<2x8x8xf32> to vector<2x8x8xbf16>
    "tpu.trace_start"() <{level = 10 : i32, message = "bqk,bkd->bqd"}> : () -> ()
    %cst_28 = arith.constant dense<0.000000e+00> : vector<2x8x8xf32>
    %102 = tpu.matmul %101, %87, %cst_28 {dimension_numbers = #tpu.dot_dimension_numbers<[2], [1], [1], [2], [0, 0, 0, 1, 1, 2], [0], [0]>} : vector<2x8x8xbf16>, vector<2x8x8xbf16>, vector<2x8x8xf32> -> vector<2x8x8xf32>
    "tpu.trace_stop"() : () -> ()
    %103 = arith.truncf %102 : vector<2x8x8xf32> to vector<2x8x8xbf16>
    %104 = vector.shape_cast %103 : vector<2x8x8xbf16> to vector<16x8xbf16>
    %c0_29 = arith.constant 0 : index
    %c24 = arith.constant 24 : index
    %105 = vector.load %arg17[%c0_29, %c24] : memref<16x32xbf16, #tpu.memory_space<vmem>>, vector<16x8xbf16>
    tpu.vector_store %arg17[%c0_29, %c24], %104 {strides = array<i32>} : memref<16x32xbf16, #tpu.memory_space<vmem>>, vector<16x8xbf16>,
    %c0_30 = arith.constant 0 : index
    %c0_31 = arith.constant 0 : index
    %106 = vector.load %arg17[%c0_30, %c0_31] : memref<16x32xbf16, #tpu.memory_space<vmem>>, vector<16x32xbf16>
    %c0_32 = arith.constant 0 : index
    %c0_33 = arith.constant 0 : index
    %107 = vector.load %arg6[%c0_32, %c0_33] : memref<32x32xbf16, #tpu.memory_space<vmem>>, vector<32x32xbf16>
    %cst_34 = arith.constant dense<0.000000e+00> : vector<16x32xf32>
    %108 = tpu.matmul %106, %107, %cst_34 {dimension_numbers = #tpu.dot_dimension_numbers<[1], [0], [0], [1], [0, 0, 1, 1], [], []>} : vector<16x32xbf16>, vector<32x32xbf16>, vector<16x32xf32> -> vector<16x32xf32>
    %c0_35 = arith.constant 0 : index
    %c0_36 = arith.constant 0 : index
    %109 = vector.load %arg7[%c0_35, %c0_36] : memref<1x32xf32, #tpu.memory_space<vmem>>, vector<1x32xf32>
    %110 = vector.broadcast %109 : vector<1x32xf32> to vector<16x32xf32>
    %111 = arith.addf %108, %110 : vector<16x32xf32>
    %112 = arith.addf %1, %111 : vector<16x32xf32>
    %cst_37 = arith.constant dense<0.000000e+00> : vector<16xf32>
    %113 = vector.multi_reduction <add>, %112, %cst_37 [1] : vector<16x32xf32> to vector<16xf32>
    %114 = vector.shape_cast %113 : vector<16xf32> to vector<16x1xf32>
    %cst_38 = arith.constant 3.200000e+01 : f32
    %115 = vector.broadcast %cst_38 : f32 to vector<16x1xf32>
    %116 = arith.divf %114, %115 : vector<16x1xf32>
    %117 = vector.broadcast %116 : vector<16x1xf32> to vector<16x32xf32>
    %118 = arith.subf %112, %117 : vector<16x32xf32>
    %119 = arith.mulf %118, %118 : vector<16x32xf32>
    %cst_39 = arith.constant dense<0.000000e+00> : vector<16xf32>
    %120 = vector.multi_reduction <add>, %119, %cst_39 [1] : vector<16x32xf32> to vector<16xf32>
    %121 = vector.shape_cast %120 : vector<16xf32> to vector<16x1xf32>
    %cst_40 = arith.constant 3.200000e+01 : f32
    %122 = vector.broadcast %cst_40 : f32 to vector<16x1xf32>
    %123 = arith.divf %121, %122 : vector<16x1xf32>
    %124 = vector.broadcast %116 : vector<16x1xf32> to vector<16x32xf32>
    %125 = arith.subf %112, %124 : vector<16x32xf32>
    %cst_41 = arith.constant 9.99999997E-7 : f32
    %126 = vector.broadcast %cst_41 : f32 to vector<16x1xf32>
    %127 = arith.addf %123, %126 : vector<16x1xf32>
    %128 = math.rsqrt %127 : vector<16x1xf32>
    %129 = vector.broadcast %128 : vector<16x1xf32> to vector<16x32xf32>
    %130 = arith.mulf %125, %129 : vector<16x32xf32>
    %c0_42 = arith.constant 0 : index
    %c0_43 = arith.constant 0 : index
    %131 = vector.load %arg8[%c0_42, %c0_43] : memref<1x32xf32, #tpu.memory_space<vmem>>, vector<1x32xf32>
    %132 = vector.broadcast %131 : vector<1x32xf32> to vector<16x32xf32>
    %133 = arith.mulf %130, %132 : vector<16x32xf32>
    %c0_44 = arith.constant 0 : index
    %c0_45 = arith.constant 0 : index
    %134 = vector.load %arg9[%c0_44, %c0_45] : memref<1x32xf32, #tpu.memory_space<vmem>>, vector<1x32xf32>
    %135 = vector.broadcast %134 : vector<1x32xf32> to vector<16x32xf32>
    %136 = arith.addf %133, %135 : vector<16x32xf32>
    %137 = arith.truncf %136 : vector<16x32xf32> to vector<16x32xbf16>
    %c0_46 = arith.constant 0 : index
    %c0_47 = arith.constant 0 : index
    %138 = vector.load %arg10[%c0_46, %c0_47] : memref<32x64xbf16, #tpu.memory_space<vmem>>, vector<32x64xbf16>
    %cst_48 = arith.constant dense<0.000000e+00> : vector<16x64xf32>
    %139 = tpu.matmul %137, %138, %cst_48 {dimension_numbers = #tpu.dot_dimension_numbers<[1], [0], [0], [1], [0, 0, 1, 1], [], []>} : vector<16x32xbf16>, vector<32x64xbf16>, vector<16x64xf32> -> vector<16x64xf32>
    %c0_49 = arith.constant 0 : index
    %c0_50 = arith.constant 0 : index
    %140 = vector.load %arg11[%c0_49, %c0_50] : memref<1x64xf32, #tpu.memory_space<vmem>>, vector<1x64xf32>
    %141 = vector.broadcast %140 : vector<1x64xf32> to vector<16x64xf32>
    %142 = arith.addf %139, %141 : vector<16x64xf32>
    %cst_51 = arith.constant 0.000000e+00 : f32
    %143 = vector.broadcast %cst_51 : f32 to vector<16x64xf32>
    %144 = arith.maximumf %142, %143 : vector<16x64xf32>
    %145 = arith.truncf %144 : vector<16x64xf32> to vector<16x64xbf16>
    %c0_52 = arith.constant 0 : index
    %c0_53 = arith.constant 0 : index
    %146 = vector.load %arg12[%c0_52, %c0_53] : memref<64x32xbf16, #tpu.memory_space<vmem>>, vector<64x32xbf16>
    %cst_54 = arith.constant dense<0.000000e+00> : vector<16x32xf32>
    %147 = tpu.matmul %145, %146, %cst_54 {dimension_numbers = #tpu.dot_dimension_numbers<[1], [0], [0], [1], [0, 0, 1, 1], [], []>} : vector<16x64xbf16>, vector<64x32xbf16>, vector<16x32xf32> -> vector<16x32xf32>
    %c0_55 = arith.constant 0 : index
    %c0_56 = arith.constant 0 : index
    %148 = vector.load %arg13[%c0_55, %c0_56] : memref<1x32xf32, #tpu.memory_space<vmem>>, vector<1x32xf32>
    %149 = vector.broadcast %148 : vector<1x32xf32> to vector<16x32xf32>
    %150 = arith.addf %147, %149 : vector<16x32xf32>
    %151 = arith.addf %136, %150 : vector<16x32xf32>
    %cst_57 = arith.constant dense<0.000000e+00> : vector<16xf32>
    %152 = vector.multi_reduction <add>, %151, %cst_57 [1] : vector<16x32xf32> to vector<16xf32>
    %153 = vector.shape_cast %152 : vector<16xf32> to vector<16x1xf32>
    %cst_58 = arith.constant 3.200000e+01 : f32
    %154 = vector.broadcast %cst_58 : f32 to vector<16x1xf32>
    %155 = arith.divf %153, %154 : vector<16x1xf32>
    %156 = vector.broadcast %155 : vector<16x1xf32> to vector<16x32xf32>
    %157 = arith.subf %151, %156 : vector<16x32xf32>
    %158 = arith.mulf %157, %157 : vector<16x32xf32>
    %cst_59 = arith.constant dense<0.000000e+00> : vector<16xf32>
    %159 = vector.multi_reduction <add>, %158, %cst_59 [1] : vector<16x32xf32> to vector<16xf32>
    %160 = vector.shape_cast %159 : vector<16xf32> to vector<16x1xf32>
    %cst_60 = arith.constant 3.200000e+01 : f32
    %161 = vector.broadcast %cst_60 : f32 to vector<16x1xf32>
    %162 = arith.divf %160, %161 : vector<16x1xf32>
    %163 = vector.broadcast %155 : vector<16x1xf32> to vector<16x32xf32>
    %164 = arith.subf %151, %163 : vector<16x32xf32>
    %cst_61 = arith.constant 9.99999997E-7 : f32
    %165 = vector.broadcast %cst_61 : f32 to vector<16x1xf32>
    %166 = arith.addf %162, %165 : vector<16x1xf32>
    %167 = math.rsqrt %166 : vector<16x1xf32>
    %168 = vector.broadcast %167 : vector<16x1xf32> to vector<16x32xf32>
    %169 = arith.mulf %164, %168 : vector<16x32xf32>
    %c0_62 = arith.constant 0 : index
    %c0_63 = arith.constant 0 : index
    %170 = vector.load %arg14[%c0_62, %c0_63] : memref<1x32xf32, #tpu.memory_space<vmem>>, vector<1x32xf32>
    %171 = vector.broadcast %170 : vector<1x32xf32> to vector<16x32xf32>
    %172 = arith.mulf %169, %171 : vector<16x32xf32>
    %c0_64 = arith.constant 0 : index
    %c0_65 = arith.constant 0 : index
    %173 = vector.load %arg15[%c0_64, %c0_65] : memref<1x32xf32, #tpu.memory_space<vmem>>, vector<1x32xf32>
    %174 = vector.broadcast %173 : vector<1x32xf32> to vector<16x32xf32>
    %175 = arith.addf %172, %174 : vector<16x32xf32>
    %c0_66 = arith.constant 0 : index
    %c0_67 = arith.constant 0 : index
    %c0_68 = arith.constant 0 : index
    %176 = vector.load %arg3[%c0_66, %c0_67, %c0_68] : memref<2x8x1xf32, #tpu.memory_space<vmem>>, vector<2x8x1xf32>
    %177 = vector.shape_cast %176 : vector<2x8x1xf32> to vector<16x1xf32>
    %178 = vector.broadcast %177 : vector<16x1xf32> to vector<16x32xf32>
    %179 = arith.mulf %175, %178 : vector<16x32xf32>
    %180 = vector.shape_cast %179 : vector<16x32xf32> to vector<2x8x32xf32>
    %c0_69 = arith.constant 0 : index
    %c0_70 = arith.constant 0 : index
    %c0_71 = arith.constant 0 : index
    %181 = vector.load %arg16[%c0_69, %c0_70, %c0_71] : memref<2x8x32xf32, #tpu.memory_space<vmem>>, vector<2x8x32xf32>
    tpu.vector_store %arg16[%c0_69, %c0_70, %c0_71], %180 {strides = array<i32>} : memref<2x8x32xf32, #tpu.memory_space<vmem>>, vector<2x8x32xf32>,
    return
  }
  func.func @transform_0(%arg0: i32) -> (i32, i32, i32) {
    %c0_i32 = arith.constant 0 : i32
    %c0_i32_0 = arith.constant 0 : i32
    %c0_i32_1 = arith.constant 0 : i32
    return %arg0, %c0_i32, %c0_i32_0 : i32, i32, i32
  }
  func.func @transform_1(%arg0: i32) -> (i32, i32, i32) {
    %c0_i32 = arith.constant 0 : i32
    %c0_i32_0 = arith.constant 0 : i32
    %c0_i32_1 = arith.constant 0 : i32
    return %arg0, %c0_i32, %c0_i32_0 : i32, i32, i32
  }
  func.func @transform_2(%arg0: i32) -> (i32, i32, i32) {
    %c0_i32 = arith.constant 0 : i32
    %c0_i32_0 = arith.constant 0 : i32
    %c0_i32_1 = arith.constant 0 : i32
    return %arg0, %c0_i32, %c0_i32_0 : i32, i32, i32
  }
  func.func @transform_3(%arg0: i32) -> (i32, i32) {
    %c0_i32 = arith.constant 0 : i32
    %c0_i32_0 = arith.constant 0 : i32
    %c0_i32_1 = arith.constant 0 : i32
    return %c0_i32, %c0_i32_0 : i32, i32
  }
  func.func @transform_4(%arg0: i32) -> (i32, i32) {
    %c0_i32 = arith.constant 0 : i32
    %c0_i32_0 = arith.constant 0 : i32
    %c0_i32_1 = arith.constant 0 : i32
    return %c0_i32, %c0_i32_0 : i32, i32
  }
  func.func @transform_5(%arg0: i32) -> (i32, i32) {
    %c0_i32 = arith.constant 0 : i32
    %c0_i32_0 = arith.constant 0 : i32
    %c0_i32_1 = arith.constant 0 : i32
    return %c0_i32, %c0_i32_0 : i32, i32
  }
  func.func @transform_6(%arg0: i32) -> (i32, i32) {
    %c0_i32 = arith.constant 0 : i32
    %c0_i32_0 = arith.constant 0 : i32
    %c0_i32_1 = arith.constant 0 : i32
    return %c0_i32, %c0_i32_0 : i32, i32
  }
  func.func @transform_7(%arg0: i32) -> (i32, i32) {
    %c0_i32 = arith.constant 0 : i32
    %c0_i32_0 = arith.constant 0 : i32
    %c0_i32_1 = arith.constant 0 : i32
    return %c0_i32, %c0_i32_0 : i32, i32
  }
  func.func @transform_8(%arg0: i32) -> (i32, i32) {
    %c0_i32 = arith.constant 0 : i32
    %c0_i32_0 = arith.constant 0 : i32
    %c0_i32_1 = arith.constant 0 : i32
    return %c0_i32, %c0_i32_0 : i32, i32
  }
  func.func @transform_9(%arg0: i32) -> (i32, i32) {
    %c0_i32 = arith.constant 0 : i32
    %c0_i32_0 = arith.constant 0 : i32
    %c0_i32_1 = arith.constant 0 : i32
    return %c0_i32, %c0_i32_0 : i32, i32
  }
  func.func @transform_10(%arg0: i32) -> (i32, i32) {
    %c0_i32 = arith.constant 0 : i32
    %c0_i32_0 = arith.constant 0 : i32
    %c0_i32_1 = arith.constant 0 : i32
    return %c0_i32, %c0_i32_0 : i32, i32
  }
  func.func @transform_11(%arg0: i32) -> (i32, i32) {
    %c0_i32 = arith.constant 0 : i32
    %c0_i32_0 = arith.constant 0 : i32
    %c0_i32_1 = arith.constant 0 : i32
    return %c0_i32, %c0_i32_0 : i32, i32
  }
  func.func @transform_12(%arg0: i32) -> (i32, i32) {
    %c0_i32 = arith.constant 0 : i32
    %c0_i32_0 = arith.constant 0 : i32
    %c0_i32_1 = arith.constant 0 : i32
    return %c0_i32, %c0_i32_0 : i32, i32
  }
  func.func @transform_13(%arg0: i32) -> (i32, i32) {
    %c0_i32 = arith.constant 0 : i32
    %c0_i32_0 = arith.constant 0 : i32
    %c0_i32_1 = arith.constant 0 : i32
    return %c0_i32, %c0_i32_0 : i32, i32
  }
  func.func @transform_14(%arg0: i32) -> (i32, i32) {
    %c0_i32 = arith.constant 0 : i32
    %c0_i32_0 = arith.constant 0 : i32
    %c0_i32_1 = arith.constant 0 : i32
    return %c0_i32, %c0_i32_0 : i32, i32
  }
  func.func @transform_15(%arg0: i32) -> (i32, i32, i32) {
    %c0_i32 = arith.constant 0 : i32
    %c0_i32_0 = arith.constant 0 : i32
    %c0_i32_1 = arith.constant 0 : i32
    return %arg0, %c0_i32, %c0_i32_0 : i32, i32, i32
  }
}

</mosaic_0001>

<llo_original>
// kernel: tpu_custom_call.1
$region0: #{tpu_custom_call.1}
  #allocation0 [shape = 'u32[]', space=smem, size = 0x4, offset = 0x4, fixed_abs, tag = 'smem constant byte address 0x4 - core index']
  #allocation1 [shape = 'u32[144,128]{1,0:T(1,128)}', space=vmem, size = 0x12000, scoped, tag = 'internal scratch']
  %s0 = inlined_call_operand.hbm [shape: f32[16,128], index: 0, kind: input, shape index: {}]
  %s1 = inlined_call_operand.hbm [shape: f32[8,128], index: 1, kind: input, shape index: {}]
  %s2 = inlined_call_operand.hbm [shape: f32[16,128], index: 2, kind: output, shape index: {}]
  %s3 = sld [smem:[#allocation0]]
  $region49: #{tpu_custom_call.1} parent=0
    _
  %s5 = ssub.s32 1, %s3
  %s6 = scalar_select 0, %s5, %s3
  $region1: #{tpu_custom_call.1} parent=0
    #allocation2 [shape = 'u8[8192]{0}', space=vmem, size = 0x2000, scoped, tag = 'input window, operand 0']
    #allocation3 [shape = 's32[2]{0}', space=sflag, size = 0x8, scoped, tag = 'scoped memory for tpu_custom_call.1']
    #allocation4 [shape = 's32[2]{0}', space=sflag, size = 0x8, scoped, tag = 'scoped memory for tpu_custom_call.1']
    #allocation5 [shape = 'u8[4096]{0}', space=vmem, size = 0x1000, scoped, tag = 'input window, operand 1, single buffered']
    #allocation6 [shape = 's32[1]{0}', space=sflag, size = 0x4, scoped, tag = 'scoped memory for tpu_custom_call.1']
    #allocation7 [shape = 'u8[8192]{0}', space=vmem, size = 0x2000, scoped, tag = 'output window, operand 0']
    %7 = vsyncpa [#allocation3], 0
    %s8 = scalar_lea.sflag [#allocation3], 1
    %9 = vsyncpa %s8, 0
    %10 = vsyncpa [#allocation6], 0
    %11 = vsyncpa [#allocation4], 0
    %s12 = scalar_lea.sflag [#allocation4], 1
    %13 = vsyncpa %s12, 0
    loop: start=0, step=1, limit=4
    $region2: #{tpu_custom_call.1} parent=1 // loop_pre_header
      _
    $region3: #{tpu_custom_call.1} parent=1 // loop_header
      %s15 = sphi 0, %s19
      %p16 = scmp.ge.s32.totalorder %s15, 4
      %s25 = sphi 0, %s27
      %s28 = sphi 0, %s25
      %s29 = sphi 0, %s28
      %s45 = sphi 0, %s29
      %s49 = sphi 0, %s49
      %s51 = sphi 0, %s49
      %s52 = sphi 0, %s51
      %s66 = sphi 0, %s52
      %s72 = sphi 0, %s74
      %s75 = sphi 0, %s72
      %s76 = sphi 0, %s75
      %s92 = sphi 0, %s76
    $region4: #{tpu_custom_call.1} parent=1 // loop_header_branch
      %18 = sbr.rel (%p16) target = $region8
    $region5: #{tpu_custom_call.1} parent=1 // loop_body
      %s20 = ssub.s32 %s15, 1
      %s21 = ssub.s32 %s15, 2
      %s22 = sadd.s32 %s15, 1
      %s23 = ssub.s32 %s15, %s22
      %p24 = scmp.eq.s32.totalorder %s23, 0
      %s26 = sadd.s32 %s25, 1
      %s27 = scalar_select %p24, %s25, %s26
      %p30 = pneg %p24
      %p31 = scmp.eq.s32.totalorder %s15, 1
      %p32 = por %p30, %p31
      %p33 = scmp.ne.s32.totalorder %s25, %s28
      %p34 = scmp.eq.s32.totalorder %s15, 0
      %p35 = por %p33, %p34
      %p36 = scmp.ne.s32.totalorder %s25, %s28
      %p37 = scmp.eq.s32.totalorder %s20, 1
      %p38 = por %p36, %p37
      %p39 = scmp.ne.s32.totalorder %s28, %s29
      %p40 = scmp.eq.s32.totalorder %s20, 0
      %p41 = por %p39, %p40
      %p42 = scmp.ne.s32.totalorder %s28, %s29
      %p43 = scmp.eq.s32.totalorder %s21, 1
      %p44 = por %p42, %p43
      %p46 = scmp.ne.s32.totalorder %s29, %s45
      %p47 = scmp.eq.s32.totalorder %s21, 0
      %p48 = por %p46, %p47
      %s50 = sadd.s32 %s49, 1
      %p53 = scmp.eq.s32.totalorder %s15, 1
      %p54 = scmp.ne.s32.totalorder %s49, %s51
      %p55 = scmp.eq.s32.totalorder %s15, 0
      %p56 = por %p54, %p55
      %p57 = scmp.ne.s32.totalorder %s49, %s51
      %p58 = scmp.eq.s32.totalorder %s20, 1
      %p59 = por %p57, %p58
      %p60 = scmp.ne.s32.totalorder %s51, %s52
      %p61 = scmp.eq.s32.totalorder %s20, 0
      %p62 = por %p60, %p61
      %p63 = scmp.ne.s32.totalorder %s51, %s52
      %p64 = scmp.eq.s32.totalorder %s21, 1
      %p65 = por %p63, %p64
      %p67 = scmp.ne.s32.totalorder %s52, %s66
      %p68 = scmp.eq.s32.totalorder %s21, 0
      %p69 = por %p67, %p68
      %s70 = ssub.s32 %s15, %s22
      %p71 = scmp.eq.s32.totalorder %s70, 0
      %s73 = sadd.s32 %s72, 1
      %s74 = scalar_select %p71, %s72, %s73
      %p77 = pneg %p71
      %p78 = scmp.eq.s32.totalorder %s15, 1
      %p79 = por %p77, %p78
      %p80 = scmp.ne.s32.totalorder %s72, %s75
      %p81 = scmp.eq.s32.totalorder %s15, 0
      %p82 = por %p80, %p81
      %p83 = scmp.ne.s32.totalorder %s72, %s75
      %p84 = scmp.eq.s32.totalorder %s20, 1
      %p85 = por %p83, %p84
      %p86 = scmp.ne.s32.totalorder %s75, %s76
      %p87 = scmp.eq.s32.totalorder %s20, 0
      %p88 = por %p86, %p87
      %p89 = scmp.ne.s32.totalorder %s75, %s76
      %p90 = scmp.eq.s32.totalorder %s21, 1
      %p91 = por %p89, %p90
      %p93 = scmp.ne.s32.totalorder %s76, %s92
      %p94 = scmp.eq.s32.totalorder %s21, 0
      %p95 = por %p93, %p94
      %p96 = scmp.le.s32.totalorder 1, %s15
      %p97 = scmp.lt.s32.totalorder %s15, 3
      %p98 = pnand %p96, %p97
      %p99 = pneg %p98
      // Predicated region
      $region9: #{tpu_custom_call.1} parent=5 // pred_check
        _
      $region10: #{tpu_custom_call.1} parent=5 // pred_check_branch
        %101 = sbr.rel (%p98) target = $region12
      $region11: #{tpu_custom_call.1} parent=5 // pred_region
        %s102 = ssub.s32 %s15, 1
        // Predicated region
        $region13: #{tpu_custom_call.1} parent=11 // pred_check
          %p103 = pneg %p62
        $region14: #{tpu_custom_call.1} parent=11 // pred_check_branch
          %105 = sbr.rel (%p103) target = $region16
        $region15: #{tpu_custom_call.1} parent=11 // pred_region
          %s107 = ssub.s32 128, 128
          %108 = vsyncadd [#allocation6], %s107
          %s110 = sshll.u32 [#allocation5], 4
          %s111 = int_to_ptr.vmem [resolvable:$true] %s110
          %113 = dma.hbm_to_vmem [thread:$0]  %s1, 128, %s111, [#allocation6]
        $region16: #{tpu_custom_call.1} parent=11 // pred_fallthru
          _
      $region12: #{tpu_custom_call.1} parent=5 // pred_fallthru
        _
      %p114 = scmp.lt.s32.totalorder %s15, 2
      // Predicated region
      $region17: #{tpu_custom_call.1} parent=5 // pred_check
        %p115 = pneg %p114
      $region18: #{tpu_custom_call.1} parent=5 // pred_check_branch
        %117 = sbr.rel (%p115) target = $region20
      $region19: #{tpu_custom_call.1} parent=5 // pred_region
        // Predicated region
        $region21: #{tpu_custom_call.1} parent=19 // pred_check
          %p118 = pneg %p35
        $region22: #{tpu_custom_call.1} parent=19 // pred_check_branch
          %120 = sbr.rel (%p118) target = $region24
        $region23: #{tpu_custom_call.1} parent=19 // pred_region
          %s121 = sand.u32 %s25, 1
          %s122 = scalar_lea.sflag [#allocation3], %s121
          %s123 = sand.u32 %s25, 1
          %s124 = smul.addr %s123, 8
          %s125 = scalar_lea.vmem [#allocation2], %s124
          %s127 = ssub.s32 128, 128
          %128 = vsyncadd %s122, %s127
          %s129 = smul.addr %s15, 128
          %s130 = scalar_lea.hbm %s0, %s129
          %s132 = sshll.u32 %s125, 4
          %s133 = int_to_ptr.vmem [resolvable:$true] %s132
          %135 = dma.hbm_to_vmem [thread:$0]  %s130, 128, %s133, %s122
        $region24: #{tpu_custom_call.1} parent=19 // pred_fallthru
          _
      $region20: #{tpu_custom_call.1} parent=5 // pred_fallthru
        _
      %p136 = scmp.le.s32.totalorder 1, %s15
      %p137 = scmp.lt.s32.totalorder %s15, 3
      %p138 = pnand %p136, %p137
      %p139 = pneg %p138
      // Predicated region
      $region25: #{tpu_custom_call.1} parent=5 // pred_check
        _
      $region26: #{tpu_custom_call.1} parent=5 // pred_check_branch
        %141 = sbr.rel (%p138) target = $region28
      $region27: #{tpu_custom_call.1} parent=5 // pred_region
        %s142 = ssub.s32 %s15, 1
        %s143 = sand.u32 %s28, 1
        %s144 = scalar_lea.sflag [#allocation3], %s143
        %s145 = sand.u32 %s28, 1
        %s146 = smul.addr %s145, 8
        %s147 = scalar_lea.vmem [#allocation2], %s146
        // Predicated region
        $region29: #{tpu_custom_call.1} parent=27 // pred_check
          %p148 = pneg %p41
        $region30: #{tpu_custom_call.1} parent=27 // pred_check_branch
          %150 = sbr.rel (%p148) target = $region32
        $region31: #{tpu_custom_call.1} parent=27 // pred_region
          %151 = dma.done %s144, 128
        $region32: #{tpu_custom_call.1} parent=27 // pred_fallthru
          _
        // Predicated region
        $region33: #{tpu_custom_call.1} parent=27 // pred_check
          %p152 = pneg %p62
        $region34: #{tpu_custom_call.1} parent=27 // pred_check_branch
          %154 = sbr.rel (%p152) target = $region36
        $region35: #{tpu_custom_call.1} parent=27 // pred_region
          %155 = dma.done [#allocation6], 128
        $region36: #{tpu_custom_call.1} parent=27 // pred_fallthru
          _
        %s156 = sand.u32 %s28, 1
        %s157 = scalar_lea.sflag [#allocation3], %s156
        %s158 = sand.u32 %s28, 1
        %s159 = smul.addr %s158, 8
        %s160 = scalar_lea.vmem [#allocation2], %s159
        %p161 = pneg %p41
        %p162 = pneg %p38
        %p163 = pneg %p62
        %p164 = pneg %p59
        %p165 = pneg %p88
        %p166 = pneg %p85
        %s167 = sand.u32 %s75, 1
        %s168 = scalar_lea.sflag [#allocation4], %s167
        %s169 = sand.u32 %s75, 1
        %s170 = smul.addr %s169, 8
        %s171 = scalar_lea.vmem [#allocation7], %s170
        %v172 = vld [vmem:[%s147] sm:$0xff]
        %v173 = vld [vmem:[#allocation5] sm:$0xff]
        %v174 = vadd.f32 %v172, %v173
        %175 = vst [vmem:[%s171] sm:$0xff] %v174
        %s176 = sand.u32 %s75, 1
        %s177 = scalar_lea.sflag [#allocation4], %s176
        %s178 = sand.u32 %s75, 1
        %s179 = smul.addr %s178, 8
        %s180 = scalar_lea.vmem [#allocation7], %s179
        // Predicated region
        $region37: #{tpu_custom_call.1} parent=27 // pred_check
          %p181 = pneg %p85
        $region38: #{tpu_custom_call.1} parent=27 // pred_check_branch
          %183 = sbr.rel (%p181) target = $region40
        $region39: #{tpu_custom_call.1} parent=27 // pred_region
          %s185 = ssub.s32 128, 128
          %186 = vsyncadd %s177, %s185
          %s187 = smul.addr %s20, 128
          %s188 = scalar_lea.hbm %s2, %s187
          %s190 = sshll.u32 %s180, 4
          %s191 = int_to_ptr.vmem [resolvable:$true] %s190
          %193 = dma.vmem_to_hbm [thread:$0]  %s191, 128, %s188, %s177
        $region40: #{tpu_custom_call.1} parent=27 // pred_fallthru
          _
      $region28: #{tpu_custom_call.1} parent=5 // pred_fallthru
        _
      %p194 = scmp.le.s32.totalorder 2, %s15
      // Predicated region
      $region41: #{tpu_custom_call.1} parent=5 // pred_check
        %p195 = pneg %p194
      $region42: #{tpu_custom_call.1} parent=5 // pred_check_branch
        %197 = sbr.rel (%p195) target = $region44
      $region43: #{tpu_custom_call.1} parent=5 // pred_region
        %s198 = ssub.s32 %s15, 2
        // Predicated region
        $region45: #{tpu_custom_call.1} parent=43 // pred_check
          %p199 = pneg %p91
        $region46: #{tpu_custom_call.1} parent=43 // pred_check_branch
          %201 = sbr.rel (%p199) target = $region48
        $region47: #{tpu_custom_call.1} parent=43 // pred_region
          %s202 = sand.u32 %s76, 1
          %s203 = scalar_lea.sflag [#allocation4], %s202
          %s204 = sand.u32 %s76, 1
          %s205 = smul.addr %s204, 8
          %s206 = scalar_lea.vmem [#allocation7], %s205
          %207 = dma.done %s203, 128
        $region48: #{tpu_custom_call.1} parent=43 // pred_fallthru
          _
      $region44: #{tpu_custom_call.1} parent=5 // pred_fallthru
        _
    $region6: #{tpu_custom_call.1} parent=1 // loop_footer
      %s19 = sadd.s32 1, %s15
    $region7: #{tpu_custom_call.1} parent=1 // loop_footer_branch
      %14 = sbr.rel target = $region3
    $region8: #{tpu_custom_call.1} parent=1 // loop_exit
      _
    %208 = vsyncpa [#allocation3], 1
    %s209 = scalar_lea.sflag [#allocation3], 1
    %210 = vsyncpa %s209, 1
    %211 = vsyncpa [#allocation6], 1
    %212 = vsyncpa [#allocation4], 1
    %s213 = scalar_lea.sflag [#allocation4], 1
    %214 = vsyncpa %s213, 1

// kernel: tpu_custom_call.1
$region0: #{tpu_custom_call.1}
  #allocation0 [shape = 'u32[]', space=smem, size = 0x4, offset = 0x4, fixed_abs, tag = 'smem constant byte address 0x4 - core index']
  #allocation1 [shape = 'u32[144,128]{1,0:T(1,128)}', space=vmem, size = 0x12000, scoped, tag = 'internal scratch']
  #allocation2 [shape = 'bf16[16,32]{1,0:T(8,128)(2,1)}', space=vmem, size = 0x1000, scoped, tag = 'scratch operand']
  %s0 = inlined_call_operand.vmem [shape: f32[2,8,32], index: 0, kind: input, shape index: {}]
  %s1 = inlined_call_operand.hbm [shape: f32[2,1,8], index: 1, kind: input, shape index: {}]
  %s2 = inlined_call_operand.vmem [shape: f32[2,8,1], index: 2, kind: input, shape index: {}]
  %s3 = inlined_call_operand.vmem [shape: bf16[32,96], index: 3, kind: input, shape index: {}]
  %s4 = inlined_call_operand.hbm [shape: f32[1,96], index: 4, kind: input, shape index: {}]
  %s5 = inlined_call_operand.vmem [shape: bf16[32,32], index: 5, kind: input, shape index: {}]
  %s6 = inlined_call_operand.hbm [shape: f32[1,32], index: 6, kind: input, shape index: {}]
  %s7 = inlined_call_operand.hbm [shape: f32[1,32], index: 7, kind: input, shape index: {}]
  %s8 = inlined_call_operand.hbm [shape: f32[1,32], index: 8, kind: input, shape index: {}]
  %s9 = inlined_call_operand.vmem [shape: bf16[32,64], index: 9, kind: input, shape index: {}]
  %s10 = inlined_call_operand.vmem [shape: f32[1,64], index: 10, kind: input, shape index: {}]
  %s11 = inlined_call_operand.vmem [shape: bf16[64,32], index: 11, kind: input, shape index: {}]
  %s12 = inlined_call_operand.vmem [shape: f32[1,32], index: 12, kind: input, shape index: {}]
  %s13 = inlined_call_operand.vmem [shape: f32[1,32], index: 13, kind: input, shape index: {}]
  %s14 = inlined_call_operand.vmem [shape: f32[1,32], index: 14, kind: input, shape index: {}]
  %s15 = inlined_call_operand.hbm [shape: f32[2,8,32], index: 15, kind: output, shape index: {}]
  %s16 = sld [smem:[#allocation0]]
  $region90: #{tpu_custom_call.1} parent=0
    _
  %s18 = ssub.s32 1, %s16
  %s19 = scalar_select 0, %s18, %s16
  $region1: #{tpu_custom_call.1} parent=0
    #allocation3 [shape = 'u8[1024]{0}', space=vmem, size = 0x400, scoped, tag = 'input window, operand 1, single buffered']
    #allocation4 [shape = 's32[1]{0}', space=sflag, size = 0x4, scoped, tag = 'scoped memory for tpu_custom_call.1']
    #allocation5 [shape = 's32[1]{0}', space=sflag, size = 0x4, scoped, tag = 'scoped memory for tpu_custom_call.1']
    #allocation6 [shape = 'u8[512]{0}', space=vmem, size = 0x400, scoped, tag = 'input window, operand 4, single buffered']
    #allocation7 [shape = 's32[1]{0}', space=sflag, size = 0x4, scoped, tag = 'scoped memory for tpu_custom_call.1']
    #allocation8 [shape = 'u8[512]{0}', space=vmem, size = 0x400, scoped, tag = 'input window, operand 6, single buffered']
    #allocation9 [shape = 'u8[512]{0}', space=vmem, size = 0x400, scoped, tag = 'input window, operand 7, single buffered']
    #allocation10 [shape = 's32[1]{0}', space=sflag, size = 0x4, scoped, tag = 'scoped memory for tpu_custom_call.1']
    #allocation11 [shape = 'u8[512]{0}', space=vmem, size = 0x400, scoped, tag = 'input window, operand 8, single buffered']
    #allocation12 [shape = 'u8[8192]{0}', space=vmem, size = 0x2000, scoped, tag = 'output window, operand 0, single buffered']
    %20 = vsyncpa [#allocation4], 0
    %21 = vsyncpa [#allocation7], 0
    %22 = vsyncpa [#allocation10], 0
    %23 = vsyncpa [#allocation5], 0
    // Predicated region
    $region2: #{tpu_custom_call.1} parent=1 // pred_check
      _
    $region3: #{tpu_custom_call.1} parent=1 // pred_check_branch
      %25 = sbr.rel (0) target = $region5
    $region4: #{tpu_custom_call.1} parent=1 // pred_region
      _
    $region5: #{tpu_custom_call.1} parent=1 // pred_fallthru
      _
    // Predicated region
    $region6: #{tpu_custom_call.1} parent=1 // pred_check
      _
    $region7: #{tpu_custom_call.1} parent=1 // pred_check_branch
      %27 = sbr.rel (0) target = $region9
    $region8: #{tpu_custom_call.1} parent=1 // pred_region
      %s29 = ssub.s32 32, 32
      %30 = vsyncadd [#allocation4], %s29
      %s31 = sshll.u32 [#allocation3], 4
      %s32 = int_to_ptr.vmem [resolvable:$true] %s31
      %37 = dma.hbm_to_vmem [thread:$0]  %s1, 32, %s32, [#allocation4], 16, 16, 1
    $region9: #{tpu_custom_call.1} parent=1 // pred_fallthru
      _
    // Predicated region
    $region10: #{tpu_custom_call.1} parent=1 // pred_check
      _
    $region11: #{tpu_custom_call.1} parent=1 // pred_check_branch
      %39 = sbr.rel (0) target = $region13
    $region12: #{tpu_custom_call.1} parent=1 // pred_region
      _
    $region13: #{tpu_custom_call.1} parent=1 // pred_fallthru
      _
    // Predicated region
    $region14: #{tpu_custom_call.1} parent=1 // pred_check
      _
    $region15: #{tpu_custom_call.1} parent=1 // pred_check_branch
      %41 = sbr.rel (0) target = $region17
    $region16: #{tpu_custom_call.1} parent=1 // pred_region
      _
    $region17: #{tpu_custom_call.1} parent=1 // pred_fallthru
      _
    // Predicated region
    $region18: #{tpu_custom_call.1} parent=1 // pred_check
      _
    $region19: #{tpu_custom_call.1} parent=1 // pred_check_branch
      %43 = sbr.rel (0) target = $region21
    $region20: #{tpu_custom_call.1} parent=1 // pred_region
      %s45 = ssub.s32 16, 16
      %46 = vsyncadd [#allocation7], %s45
      %s48 = sshll.u32 [#allocation6], 4
      %s49 = int_to_ptr.vmem [resolvable:$true] %s48
      %51 = dma.hbm_to_vmem [thread:$0]  %s4, 16, %s49, [#allocation7]
    $region21: #{tpu_custom_call.1} parent=1 // pred_fallthru
      _
    // Predicated region
    $region22: #{tpu_custom_call.1} parent=1 // pred_check
      _
    $region23: #{tpu_custom_call.1} parent=1 // pred_check_branch
      %53 = sbr.rel (0) target = $region25
    $region24: #{tpu_custom_call.1} parent=1 // pred_region
      _
    $region25: #{tpu_custom_call.1} parent=1 // pred_fallthru
      _
    // Predicated region
    $region26: #{tpu_custom_call.1} parent=1 // pred_check
      _
    $region27: #{tpu_custom_call.1} parent=1 // pred_check_branch
      %55 = sbr.rel (0) target = $region29
    $region28: #{tpu_custom_call.1} parent=1 // pred_region
      %s57 = ssub.s32 16, 16
      %58 = vsyncadd [#allocation7], %s57
      %s60 = sshll.u32 [#allocation8], 4
      %s61 = int_to_ptr.vmem [resolvable:$true] %s60
      %63 = dma.hbm_to_vmem [thread:$0]  %s6, 16, %s61, [#allocation7]
    $region29: #{tpu_custom_call.1} parent=1 // pred_fallthru
      _
    // Predicated region
    $region30: #{tpu_custom_call.1} parent=1 // pred_check
      _
    $region31: #{tpu_custom_call.1} parent=1 // pred_check_branch
      %65 = sbr.rel (0) target = $region33
    $region32: #{tpu_custom_call.1} parent=1 // pred_region
      %s67 = ssub.s32 16, 16
      %68 = vsyncadd [#allocation10], %s67
      %s70 = sshll.u32 [#allocation9], 4
      %s71 = int_to_ptr.vmem [resolvable:$true] %s70
      %73 = dma.hbm_to_vmem [thread:$0]  %s7, 16, %s71, [#allocation10]
    $region33: #{tpu_custom_call.1} parent=1 // pred_fallthru
      _
    // Predicated region
    $region34: #{tpu_custom_call.1} parent=1 // pred_check
      _
    $region35: #{tpu_custom_call.1} parent=1 // pred_check_branch
      %75 = sbr.rel (0) target = $region37
    $region36: #{tpu_custom_call.1} parent=1 // pred_region
      %s77 = ssub.s32 16, 16
      %78 = vsyncadd [#allocation10], %s77
      %s80 = sshll.u32 [#allocation11], 4
      %s81 = int_to_ptr.vmem [resolvable:$true] %s80
      %83 = dma.hbm_to_vmem [thread:$0]  %s8, 16, %s81, [#allocation10]
    $region37: #{tpu_custom_call.1} parent=1 // pred_fallthru
      _
    // Predicated region
    $region38: #{tpu_custom_call.1} parent=1 // pred_check
      _
    $region39: #{tpu_custom_call.1} parent=1 // pred_check_branch
      %85 = sbr.rel (0) target = $region41
    $region40: #{tpu_custom_call.1} parent=1 // pred_region
      _
    $region41: #{tpu_custom_call.1} parent=1 // pred_fallthru
      _
    // Predicated region
    $region42: #{tpu_custom_call.1} parent=1 // pred_check
      _
    $region43: #{tpu_custom_call.1} parent=1 // pred_check_branch
      %87 = sbr.rel (0) target = $region45
    $region44: #{tpu_custom_call.1} parent=1 // pred_region
      _
    $region45: #{tpu_custom_call.1} parent=1 // pred_fallthru
      _
    // Predicated region
    $region46: #{tpu_custom_call.1} parent=1 // pred_check
      _
    $region47: #{tpu_custom_call.1} parent=1 // pred_check_branch
      %89 = sbr.rel (0) target = $region49
    $region48: #{tpu_custom_call.1} parent=1 // pred_region
      _
    $region49: #{tpu_custom_call.1} parent=1 // pred_fallthru
      _
    // Predicated region
    $region50: #{tpu_custom_call.1} parent=1 // pred_check
      _
    $region51: #{tpu_custom_call.1} parent=1 // pred_check_branch
      %91 = sbr.rel (0) target = $region53
    $region52: #{tpu_custom_call.1} parent=1 // pred_region
      _
    $region53: #{tpu_custom_call.1} parent=1 // pred_fallthru
      _
    // Predicated region
    $region54: #{tpu_custom_call.1} parent=1 // pred_check
      _
    $region55: #{tpu_custom_call.1} parent=1 // pred_check_branch
      %93 = sbr.rel (0) target = $region57
    $region56: #{tpu_custom_call.1} parent=1 // pred_region
      _
    $region57: #{tpu_custom_call.1} parent=1 // pred_fallthru
      _
    // Predicated region
    $region58: #{tpu_custom_call.1} parent=1 // pred_check
      _
    $region59: #{tpu_custom_call.1} parent=1 // pred_check_branch
      %95 = sbr.rel (0) target = $region61
    $region60: #{tpu_custom_call.1} parent=1 // pred_region
      _
    $region61: #{tpu_custom_call.1} parent=1 // pred_fallthru
      _
    // Predicated region
    $region62: #{tpu_custom_call.1} parent=1 // pred_check
      _
    $region63: #{tpu_custom_call.1} parent=1 // pred_check_branch
      %97 = sbr.rel (0) target = $region65
    $region64: #{tpu_custom_call.1} parent=1 // pred_region
      %98 = dma.done [#allocation4], 32
    $region65: #{tpu_custom_call.1} parent=1 // pred_fallthru
      _
    // Predicated region
    $region66: #{tpu_custom_call.1} parent=1 // pred_check
      _
    $region67: #{tpu_custom_call.1} parent=1 // pred_check_branch
      %100 = sbr.rel (0) target = $region69
    $region68: #{tpu_custom_call.1} parent=1 // pred_region
      %101 = dma.done [#allocation7], 16
    $region69: #{tpu_custom_call.1} parent=1 // pred_fallthru
      _
    // Predicated region
    $region70: #{tpu_custom_call.1} parent=1 // pred_check
      _
    $region71: #{tpu_custom_call.1} parent=1 // pred_check_branch
      %103 = sbr.rel (0) target = $region73
    $region72: #{tpu_custom_call.1} parent=1 // pred_region
      %104 = dma.done [#allocation7], 16
    $region73: #{tpu_custom_call.1} parent=1 // pred_fallthru
      _
    // Predicated region
    $region74: #{tpu_custom_call.1} parent=1 // pred_check
      _
    $region75: #{tpu_custom_call.1} parent=1 // pred_check_branch
      %106 = sbr.rel (0) target = $region77
    $region76: #{tpu_custom_call.1} parent=1 // pred_region
      %107 = dma.done [#allocation10], 16
    $region77: #{tpu_custom_call.1} parent=1 // pred_fallthru
      _
    // Predicated region
    $region78: #{tpu_custom_call.1} parent=1 // pred_check
      _
    $region79: #{tpu_custom_call.1} parent=1 // pred_check_branch
      %109 = sbr.rel (0) target = $region81
    $region80: #{tpu_custom_call.1} parent=1 // pred_region
      %110 = dma.done [#allocation10], 16
    $region81: #{tpu_custom_call.1} parent=1 // pred_fallthru
      _
    %v112 = vld [vmem:[%s0] sm:$0xff]
    %v113 = vld [vmem:[%s0 + $0x8] sm:$0xff]
    %v114 = vpack.c.bf16 %v113, %v112
    %v115 = vld [vmem:[%s3] sm:$0xf]
    %v116 = vld [vmem:[%s3 + $0x4] sm:$0xf]
    %v117 = vld [vmem:[%s3 + $0x8] sm:$0xf]
    %v118 = vld [vmem:[%s3 + $0xc] sm:$0xf]
    %v119 = vld [vmem:[#allocation6] sm:$0x1]
    %v121 = vlaneseq
    %v122 = vshrl.u32 %v121, 7
    %v123 = vsub.s32 0, %v122
    %v124 = vrot.slane %v119, %v123
    %v130 = vunpack.c.l.b16 %v115
    %v131 = vunpack.c.l.b16 %v116
    %v132 = vunpack.c.l.b16 %v117
    %v133 = vunpack.c.l.b16 %v118
    %v134 = vpack.c.b16 %v131, %v130
    %v135 = vpack.c.b16 %v133, %v132
    %vm138 = vcmask 261120
    %v140 = vsel %vm138, %v114, 0
    %142 = vmatprep.subr.bf16.mxu0 0
    %143 = vmatpush1.bf16.msra.mxu0 0
    %144 = vmatprep.subr.bf16.mxu0 0
    %145 = vmatpush1.bf16.msra.mxu0 0
    %146 = vmatprep.subr.bf16.mxu0 0
    %147 = vmatpush1.bf16.msra.mxu0 0
    %148 = vmatprep.subr.bf16.mxu0 0
    %149 = vmatpush1.bf16.msra.mxu0 0
    %150 = vmatprep.subr.bf16.mxu0 0
    %151 = vmatpush1.bf16.msra.mxu0 0
    %152 = vmatprep.subr.bf16.mxu0 0
    %153 = vmatpush1.bf16.msra.mxu0 0
    %154 = vmatprep.subr.bf16.mxu0 0
    %155 = vmatpush1.bf16.msra.mxu0 %v135
    %156 = vmatprep.subr.bf16.mxu0 0
    %157 = vmatpush1.bf16.msra.mxu0 %v134
    %158 = vmatprep.subr.bf16.mxu0 0
    %159 = vmatpush2.bf16.msra.mxu0 0
    %160 = vmatprep.subr.bf16.mxu0 0
    %161 = vmatpush2.bf16.msra.mxu0 0
    %162 = vmatprep.subr.bf16.mxu0 0
    %163 = vmatpush2.bf16.msra.mxu0 0
    %164 = vmatprep.subr.bf16.mxu0 0
    %165 = vmatpush2.bf16.msra.mxu0 0
    %166 = vmatprep.subr.bf16.mxu0 0
    %167 = vmatpush2.bf16.msra.mxu0 0
    %168 = vmatprep.subr.bf16.mxu0 0
    %169 = vmatpush2.bf16.msra.mxu0 0
    %170 = vmatprep.subr.bf16.mxu0 0
    %171 = vmatpush2.bf16.msra.mxu0 0
    %172 = vmatprep.subr.bf16.mxu0 0
    %173 = vmatpush2.bf16.msra.mxu0 0
    %174 = vmatprep.mubr.bf16.mxu0 0
    %175 = vmatmul.mubr.bf16.gmra.mxu0 %v140
    %v176 = vpop.f32.mrf.mxu0
    %v177 = vadd.f32 %v124, %v176
    %v178 = vpop.f32.mrf.mxu0
    %v179 = vpop.f32.mrf.mxu0
    %v180 = vadd.f32 %v124, %v179
    %v181 = vpop.f32.mrf.mxu0
    %182 = vdwg.mxu0
    %v183 = vpack.c.bf16 %v180, %v177
    %v184 = vld [vmem:[#allocation3] sm:$0x1]
    %v185 = vld [vmem:[#allocation3 + $0x1] sm:$0x1]
    %v187 = vunpack.c.l.b16 %v183
    %v188 = vunpack.c.h.b16 %v183
    %v189 = vpack.c.b16 %v187, %v187
    %v190 = vpack.c.b16 %v188, %v188
    %v193 = vlaneseq
    %v194 = vshrl.u32 %v193, 7
    %v195 = vsub.s32 0, %v194
    %v196 = vrot.slane %v184, %v195
    %v197 = vlaneseq
    %v198 = vshrl.u32 %v197, 7
    %v199 = vsub.s32 0, %v198
    %v200 = vrot.slane %v185, %v199
    %203 = vrot.lane.b32.xlu0 %v189, 96
    %v204 = vpop.permute.xlu0 %203
    %vm205 = vcmask 64512
    %v207 = vsel %vm205, %v189, 0
    %v210 = vsel %vm205, %v204, 0
    %212 = vmatprep.subr.bf16.mxu0 0
    %213 = vmatpush1.bf16.xpose.msra.mxu0 0
    %214 = vmatprep.subr.bf16.mxu0 0
    %215 = vmatpush1.bf16.xpose.msra.mxu0 0
    %216 = vmatprep.subr.bf16.mxu0 0
    %217 = vmatpush1.bf16.xpose.msra.mxu0 0
    %218 = vmatprep.subr.bf16.mxu0 0
    %219 = vmatpush1.bf16.xpose.msra.mxu0 0
    %220 = vmatprep.subr.bf16.mxu0 0
    %221 = vmatpush1.bf16.xpose.msra.mxu0 0
    %222 = vmatprep.subr.bf16.mxu0 0
    %223 = vmatpush1.bf16.xpose.msra.mxu0 0
    %224 = vmatprep.subr.bf16.mxu0 0
    %225 = vmatpush1.bf16.xpose.msra.mxu0 0
    %226 = vmatprep.subr.bf16.mxu0 0
    %227 = vmatpush1.bf16.xpose.msra.mxu0 %v210
    %228 = vmatprep.subr.bf16.mxu0 0
    %229 = vmatpush2.bf16.xpose.msra.mxu0 0
    %230 = vmatprep.subr.bf16.mxu0 0
    %231 = vmatpush2.bf16.xpose.msra.mxu0 0
    %232 = vmatprep.subr.bf16.mxu0 0
    %233 = vmatpush2.bf16.xpose.msra.mxu0 0
    %234 = vmatprep.subr.bf16.mxu0 0
    %235 = vmatpush2.bf16.xpose.msra.mxu0 0
    %236 = vmatprep.subr.bf16.mxu0 0
    %237 = vmatpush2.bf16.xpose.msra.mxu0 0
    %238 = vmatprep.subr.bf16.mxu0 0
    %239 = vmatpush2.bf16.xpose.msra.mxu0 0
    %240 = vmatprep.subr.bf16.mxu0 0
    %241 = vmatpush2.bf16.xpose.msra.mxu0 0
    %242 = vmatprep.subr.bf16.mxu0 0
    %243 = vmatpush2.bf16.xpose.msra.mxu0 0
    %244 = vmatprep.mubr.bf16.mxu0 0
    %245 = vmatmul.mubr.bf16.gmra.mxu0 %v207
    %v246 = vpop.f32.mrf.mxu0
    %v247 = vadd.f32 %v196, %v246
    %v248 = vpop.f32.mrf.mxu0
    %v249 = vpop.f32.mrf.mxu0
    %v250 = vpop.f32.mrf.mxu0
    %251 = vdwg.mxu0
    %252 = vrot.lane.b32.xlu0 %v190, 96
    %v253 = vpop.permute.xlu0 %252
    %v255 = vsel %vm205, %v190, 0
    %v258 = vsel %vm205, %v253, 0
    %260 = vmatprep.subr.bf16.mxu0 0
    %261 = vmatpush1.bf16.xpose.msra.mxu0 0
    %262 = vmatprep.subr.bf16.mxu0 0
    %263 = vmatpush1.bf16.xpose.msra.mxu0 0
    %264 = vmatprep.subr.bf16.mxu0 0
    %265 = vmatpush1.bf16.xpose.msra.mxu0 0
    %266 = vmatprep.subr.bf16.mxu0 0
    %267 = vmatpush1.bf16.xpose.msra.mxu0 0
    %268 = vmatprep.subr.bf16.mxu0 0
    %269 = vmatpush1.bf16.xpose.msra.mxu0 0
    %270 = vmatprep.subr.bf16.mxu0 0
    %271 = vmatpush1.bf16.xpose.msra.mxu0 0
    %272 = vmatprep.subr.bf16.mxu0 0
    %273 = vmatpush1.bf16.xpose.msra.mxu0 0
    %274 = vmatprep.subr.bf16.mxu0 0
    %275 = vmatpush1.bf16.xpose.msra.mxu0 %v258
    %276 = vmatprep.subr.bf16.mxu0 0
    %277 = vmatpush2.bf16.xpose.msra.mxu0 0
    %278 = vmatprep.subr.bf16.mxu0 0
    %279 = vmatpush2.bf16.xpose.msra.mxu0 0
    %280 = vmatprep.subr.bf16.mxu0 0
    %281 = vmatpush2.bf16.xpose.msra.mxu0 0
    %282 = vmatprep.subr.bf16.mxu0 0
    %283 = vmatpush2.bf16.xpose.msra.mxu0 0
    %284 = vmatprep.subr.bf16.mxu0 0
    %285 = vmatpush2.bf16.xpose.msra.mxu0 0
    %286 = vmatprep.subr.bf16.mxu0 0
    %287 = vmatpush2.bf16.xpose.msra.mxu0 0
    %288 = vmatprep.subr.bf16.mxu0 0
    %289 = vmatpush2.bf16.xpose.msra.mxu0 0
    %290 = vmatprep.subr.bf16.mxu0 0
    %291 = vmatpush2.bf16.xpose.msra.mxu0 0
    %292 = vmatprep.mubr.bf16.mxu0 0
    %293 = vmatmul.mubr.bf16.gmra.mxu0 %v255
    %v294 = vpop.f32.mrf.mxu0
    %v295 = vadd.f32 %v200, %v294
    %v296 = vpop.f32.mrf.mxu0
    %v297 = vpop.f32.mrf.mxu0
    %v298 = vpop.f32.mrf.mxu0
    %299 = vdwg.mxu0
    %v300 = vsel %vm205, %v247, -inf
    %301 = vmax.xlane.f32.xlu0 %v300
    %v302 = vpop.xlane.xlu0 %301
    %v303 = vsel %vm205, %v295, -inf
    %304 = vmax.xlane.f32.xlu0 %v303
    %v305 = vpop.xlane.xlu0 %304
    %v306 = vsub.f32 %v247, %v302
    %v307 = vsub.f32 %v295, %v305
    %v308 = vmul.f32 %v306, 1.442695
    %v309 = vpow.pop %v308
    %v310 = vmul.f32 %v307, 1.442695
    %v311 = vpow.pop %v310
    %v312 = vsel %vm205, %v309, 0.0
    %313 = vadd.xlane.f32.xlu0 %v312
    %v314 = vpop.xlane.xlu0 %313
    %v315 = vsel %vm205, %v311, 0.0
    %316 = vadd.xlane.f32.xlu0 %v315
    %v317 = vpop.xlane.xlu0 %316
    %v318 = vrcp.pop %v314
    %v319 = vrcp.pop %v317
    %v320 = vmul.f32 %v309, %v318
    %v321 = vmul.f32 %v311, %v319
    %v322 = vpack.c.bf16 %v320, %v320
    %v323 = vpack.c.bf16 %v321, %v321
    %324 = vrot.lane.b32.xlu0 %v189, 64
    %v325 = vpop.permute.xlu0 %324
    %v327 = vsel %vm205, %v322, 0
    %vm329 = vcmask 1043456
    %v331 = vsel %vm329, %v325, 0
    %333 = vmatprep.subr.bf16.mxu0 0
    %334 = vmatpush1.bf16.msra.mxu0 0
    %335 = vmatprep.subr.bf16.mxu0 0
    %336 = vmatpush1.bf16.msra.mxu0 0
    %337 = vmatprep.subr.bf16.mxu0 0
    %338 = vmatpush1.bf16.msra.mxu0 0
    %339 = vmatprep.subr.bf16.mxu0 0
    %340 = vmatpush1.bf16.msra.mxu0 0
    %341 = vmatprep.subr.bf16.mxu0 0
    %342 = vmatpush1.bf16.msra.mxu0 0
    %343 = vmatprep.subr.bf16.mxu0 0
    %344 = vmatpush1.bf16.msra.mxu0 0
    %345 = vmatprep.subr.bf16.mxu0 0
    %346 = vmatpush1.bf16.msra.mxu0 0
    %347 = vmatprep.subr.bf16.mxu0 0
    %348 = vmatpush1.bf16.msra.mxu0 %v331
    %349 = vmatprep.subr.bf16.mxu0 0
    %350 = vmatpush2.bf16.msra.mxu0 0
    %351 = vmatprep.subr.bf16.mxu0 0
    %352 = vmatpush2.bf16.msra.mxu0 0
    %353 = vmatprep.subr.bf16.mxu0 0
    %354 = vmatpush2.bf16.msra.mxu0 0
    %355 = vmatprep.subr.bf16.mxu0 0
    %356 = vmatpush2.bf16.msra.mxu0 0
    %357 = vmatprep.subr.bf16.mxu0 0
    %358 = vmatpush2.bf16.msra.mxu0 0
    %359 = vmatprep.subr.bf16.mxu0 0
    %360 = vmatpush2.bf16.msra.mxu0 0
    %361 = vmatprep.subr.bf16.mxu0 0
    %362 = vmatpush2.bf16.msra.mxu0 0
    %363 = vmatprep.subr.bf16.mxu0 0
    %364 = vmatpush2.bf16.msra.mxu0 0
    %365 = vmatprep.mubr.bf16.mxu0 0
    %366 = vmatmul.mubr.bf16.gmra.mxu0 %v327
    %v367 = vpop.f32.mrf.mxu0
    %v368 = vadd.f32 0.0, %v367
    %v369 = vpop.f32.mrf.mxu0
    %v370 = vpop.f32.mrf.mxu0
    %v371 = vpop.f32.mrf.mxu0
    %372 = vdwg.mxu0
    %373 = vrot.lane.b32.xlu0 %v190, 64
    %v374 = vpop.permute.xlu0 %373
    %v376 = vsel %vm205, %v323, 0
    %v379 = vsel %vm329, %v374, 0
    %381 = vmatprep.subr.bf16.mxu0 0
    %382 = vmatpush1.bf16.msra.mxu0 0
    %383 = vmatprep.subr.bf16.mxu0 0
    %384 = vmatpush1.bf16.msra.mxu0 0
    %385 = vmatprep.subr.bf16.mxu0 0
    %386 = vmatpush1.bf16.msra.mxu0 0
    %387 = vmatprep.subr.bf16.mxu0 0
    %388 = vmatpush1.bf16.msra.mxu0 0
    %389 = vmatprep.subr.bf16.mxu0 0
    %390 = vmatpush1.bf16.msra.mxu0 0
    %391 = vmatprep.subr.bf16.mxu0 0
    %392 = vmatpush1.bf16.msra.mxu0 0
    %393 = vmatprep.subr.bf16.mxu0 0
    %394 = vmatpush1.bf16.msra.mxu0 0
    %395 = vmatprep.subr.bf16.mxu0 0
    %396 = vmatpush1.bf16.msra.mxu0 %v379
    %397 = vmatprep.subr.bf16.mxu0 0
    %398 = vmatpush2.bf16.msra.mxu0 0
    %399 = vmatprep.subr.bf16.mxu0 0
    %400 = vmatpush2.bf16.msra.mxu0 0
    %401 = vmatprep.subr.bf16.mxu0 0
    %402 = vmatpush2.bf16.msra.mxu0 0
    %403 = vmatprep.subr.bf16.mxu0 0
    %404 = vmatpush2.bf16.msra.mxu0 0
    %405 = vmatprep.subr.bf16.mxu0 0
    %406 = vmatpush2.bf16.msra.mxu0 0
    %407 = vmatprep.subr.bf16.mxu0 0
    %408 = vmatpush2.bf16.msra.mxu0 0
    %409 = vmatprep.subr.bf16.mxu0 0
    %410 = vmatpush2.bf16.msra.mxu0 0
    %411 = vmatprep.subr.bf16.mxu0 0
    %412 = vmatpush2.bf16.msra.mxu0 0
    %413 = vmatprep.mubr.bf16.mxu0 0
    %414 = vmatmul.mubr.bf16.gmra.mxu0 %v376
    %v415 = vpop.f32.mrf.mxu0
    %v416 = vadd.f32 0.0, %v415
    %v417 = vpop.f32.mrf.mxu0
    %v418 = vpop.f32.mrf.mxu0
    %v419 = vpop.f32.mrf.mxu0
    %420 = vdwg.mxu0
    %v421 = vpack.c.bf16 %v368, %v368
    %v422 = vpack.c.bf16 %v416, %v416
    %vm423 = vcmask 60416
    %424 = vst.msk [vmem:[#allocation2] sm:$0xf] %vm423, %v421
    %425 = vst.msk [vmem:[#allocation2 + $0x4] sm:$0xf] %vm423, %v422
    %426 = vrot.lane.b32.xlu0 %v189, 120
    %v427 = vpop.permute.xlu0 %426
    %428 = vrot.lane.b32.xlu0 %v189, 88
    %v429 = vpop.permute.xlu0 %428
    %v431 = vsel %vm205, %v427, 0
    %v434 = vsel %vm205, %v429, 0
    %436 = vmatprep.subr.bf16.mxu0 0
    %437 = vmatpush1.bf16.xpose.msra.mxu0 0
    %438 = vmatprep.subr.bf16.mxu0 0
    %439 = vmatpush1.bf16.xpose.msra.mxu0 0
    %440 = vmatprep.subr.bf16.mxu0 0
    %441 = vmatpush1.bf16.xpose.msra.mxu0 0
    %442 = vmatprep.subr.bf16.mxu0 0
    %443 = vmatpush1.bf16.xpose.msra.mxu0 0
    %444 = vmatprep.subr.bf16.mxu0 0
    %445 = vmatpush1.bf16.xpose.msra.mxu0 0
    %446 = vmatprep.subr.bf16.mxu0 0
    %447 = vmatpush1.bf16.xpose.msra.mxu0 0
    %448 = vmatprep.subr.bf16.mxu0 0
    %449 = vmatpush1.bf16.xpose.msra.mxu0 0
    %450 = vmatprep.subr.bf16.mxu0 0
    %451 = vmatpush1.bf16.xpose.msra.mxu0 %v434
    %452 = vmatprep.subr.bf16.mxu0 0
    %453 = vmatpush2.bf16.xpose.msra.mxu0 0
    %454 = vmatprep.subr.bf16.mxu0 0
    %455 = vmatpush2.bf16.xpose.msra.mxu0 0
    %456 = vmatprep.subr.bf16.mxu0 0
    %457 = vmatpush2.bf16.xpose.msra.mxu0 0
    %458 = vmatprep.subr.bf16.mxu0 0
    %459 = vmatpush2.bf16.xpose.msra.mxu0 0
    %460 = vmatprep.subr.bf16.mxu0 0
    %461 = vmatpush2.bf16.xpose.msra.mxu0 0
    %462 = vmatprep.subr.bf16.mxu0 0
    %463 = vmatpush2.bf16.xpose.msra.mxu0 0
    %464 = vmatprep.subr.bf16.mxu0 0
    %465 = vmatpush2.bf16.xpose.msra.mxu0 0
    %466 = vmatprep.subr.bf16.mxu0 0
    %467 = vmatpush2.bf16.xpose.msra.mxu0 0
    %468 = vmatprep.mubr.bf16.mxu0 0
    %469 = vmatmul.mubr.bf16.gmra.mxu0 %v431
    %v470 = vpop.f32.mrf.mxu0
    %v471 = vadd.f32 %v196, %v470
    %v472 = vpop.f32.mrf.mxu0
    %v473 = vpop.f32.mrf.mxu0
    %v474 = vpop.f32.mrf.mxu0
    %475 = vdwg.mxu0
    %476 = vrot.lane.b32.xlu0 %v190, 120
    %v477 = vpop.permute.xlu0 %476
    %478 = vrot.lane.b32.xlu0 %v190, 88
    %v479 = vpop.permute.xlu0 %478
    %v481 = vsel %vm205, %v477, 0
    %v484 = vsel %vm205, %v479, 0
    %486 = vmatprep.subr.bf16.mxu0 0
    %487 = vmatpush1.bf16.xpose.msra.mxu0 0
    %488 = vmatprep.subr.bf16.mxu0 0
    %489 = vmatpush1.bf16.xpose.msra.mxu0 0
    %490 = vmatprep.subr.bf16.mxu0 0
    %491 = vmatpush1.bf16.xpose.msra.mxu0 0
    %492 = vmatprep.subr.bf16.mxu0 0
    %493 = vmatpush1.bf16.xpose.msra.mxu0 0
    %494 = vmatprep.subr.bf16.mxu0 0
    %495 = vmatpush1.bf16.xpose.msra.mxu0 0
    %496 = vmatprep.subr.bf16.mxu0 0
    %497 = vmatpush1.bf16.xpose.msra.mxu0 0
    %498 = vmatprep.subr.bf16.mxu0 0
    %499 = vmatpush1.bf16.xpose.msra.mxu0 0
    %500 = vmatprep.subr.bf16.mxu0 0
    %501 = vmatpush1.bf16.xpose.msra.mxu0 %v484
    %502 = vmatprep.subr.bf16.mxu0 0
    %503 = vmatpush2.bf16.xpose.msra.mxu0 0
    %504 = vmatprep.subr.bf16.mxu0 0
    %505 = vmatpush2.bf16.xpose.msra.mxu0 0
    %506 = vmatprep.subr.bf16.mxu0 0
    %507 = vmatpush2.bf16.xpose.msra.mxu0 0
    %508 = vmatprep.subr.bf16.mxu0 0
    %509 = vmatpush2.bf16.xpose.msra.mxu0 0
    %510 = vmatprep.subr.bf16.mxu0 0
    %511 = vmatpush2.bf16.xpose.msra.mxu0 0
    %512 = vmatprep.subr.bf16.mxu0 0
    %513 = vmatpush2.bf16.xpose.msra.mxu0 0
    %514 = vmatprep.subr.bf16.mxu0 0
    %515 = vmatpush2.bf16.xpose.msra.mxu0 0
    %516 = vmatprep.subr.bf16.mxu0 0
    %517 = vmatpush2.bf16.xpose.msra.mxu0 0
    %518 = vmatprep.mubr.bf16.mxu0 0
    %519 = vmatmul.mubr.bf16.gmra.mxu0 %v481
    %v520 = vpop.f32.mrf.mxu0
    %v521 = vadd.f32 %v200, %v520
    %v522 = vpop.f32.mrf.mxu0
    %v523 = vpop.f32.mrf.mxu0
    %v524 = vpop.f32.mrf.mxu0
    %525 = vdwg.mxu0
    %v526 = vsel %vm205, %v471, -inf
    %527 = vmax.xlane.f32.xlu0 %v526
    %v528 = vpop.xlane.xlu0 %527
    %v529 = vsel %vm205, %v521, -inf
    %530 = vmax.xlane.f32.xlu0 %v529
    %v531 = vpop.xlane.xlu0 %530
    %v532 = vsub.f32 %v471, %v528
    %v533 = vsub.f32 %v521, %v531
    %v534 = vmul.f32 %v532, 1.442695
    %v535 = vpow.pop %v534
    %v536 = vmul.f32 %v533, 1.442695
    %v537 = vpow.pop %v536
    %v538 = vsel %vm205, %v535, 0.0
    %539 = vadd.xlane.f32.xlu0 %v538
    %v540 = vpop.xlane.xlu0 %539
    %v541 = vsel %vm205, %v537, 0.0
    %542 = vadd.xlane.f32.xlu0 %v541
    %v543 = vpop.xlane.xlu0 %542
    %v544 = vrcp.pop %v540
    %v545 = vrcp.pop %v543
    %v546 = vmul.f32 %v535, %v544
    %v547 = vmul.f32 %v537, %v545
    %v548 = vpack.c.bf16 %v546, %v546
    %v549 = vpack.c.bf16 %v547, %v547
    %550 = vrot.lane.b32.xlu0 %v189, 56
    %v551 = vpop.permute.xlu0 %550
    %v553 = vsel %vm205, %v548, 0
    %v556 = vsel %vm329, %v551, 0
    %558 = vmatprep.subr.bf16.mxu0 0
    %559 = vmatpush1.bf16.msra.mxu0 0
    %560 = vmatprep.subr.bf16.mxu0 0
    %561 = vmatpush1.bf16.msra.mxu0 0
    %562 = vmatprep.subr.bf16.mxu0 0
    %563 = vmatpush1.bf16.msra.mxu0 0
    %564 = vmatprep.subr.bf16.mxu0 0
    %565 = vmatpush1.bf16.msra.mxu0 0
    %566 = vmatprep.subr.bf16.mxu0 0
    %567 = vmatpush1.bf16.msra.mxu0 0
    %568 = vmatprep.subr.bf16.mxu0 0
    %569 = vmatpush1.bf16.msra.mxu0 0
    %570 = vmatprep.subr.bf16.mxu0 0
    %571 = vmatpush1.bf16.msra.mxu0 0
    %572 = vmatprep.subr.bf16.mxu0 0
    %573 = vmatpush1.bf16.msra.mxu0 %v556
    %574 = vmatprep.subr.bf16.mxu0 0
    %575 = vmatpush2.bf16.msra.mxu0 0
    %576 = vmatprep.subr.bf16.mxu0 0
    %577 = vmatpush2.bf16.msra.mxu0 0
    %578 = vmatprep.subr.bf16.mxu0 0
    %579 = vmatpush2.bf16.msra.mxu0 0
    %580 = vmatprep.subr.bf16.mxu0 0
    %581 = vmatpush2.bf16.msra.mxu0 0
    %582 = vmatprep.subr.bf16.mxu0 0
    %583 = vmatpush2.bf16.msra.mxu0 0
    %584 = vmatprep.subr.bf16.mxu0 0
    %585 = vmatpush2.bf16.msra.mxu0 0
    %586 = vmatprep.subr.bf16.mxu0 0
    %587 = vmatpush2.bf16.msra.mxu0 0
    %588 = vmatprep.subr.bf16.mxu0 0
    %589 = vmatpush2.bf16.msra.mxu0 0
    %590 = vmatprep.mubr.bf16.mxu0 0
    %591 = vmatmul.mubr.bf16.gmra.mxu0 %v553
    %v592 = vpop.f32.mrf.mxu0
    %v593 = vadd.f32 0.0, %v592
    %v594 = vpop.f32.mrf.mxu0
    %v595 = vpop.f32.mrf.mxu0
    %v596 = vpop.f32.mrf.mxu0
    %597 = vdwg.mxu0
    %598 = vrot.lane.b32.xlu0 %v190, 56
    %v599 = vpop.permute.xlu0 %598
    %v601 = vsel %vm205, %v549, 0
    %v604 = vsel %vm329, %v599, 0
    %606 = vmatprep.subr.bf16.mxu0 0
    %607 = vmatpush1.bf16.msra.mxu0 0
    %608 = vmatprep.subr.bf16.mxu0 0
    %609 = vmatpush1.bf16.msra.mxu0 0
    %610 = vmatprep.subr.bf16.mxu0 0
    %611 = vmatpush1.bf16.msra.mxu0 0
    %612 = vmatprep.subr.bf16.mxu0 0
    %613 = vmatpush1.bf16.msra.mxu0 0
    %614 = vmatprep.subr.bf16.mxu0 0
    %615 = vmatpush1.bf16.msra.mxu0 0
    %616 = vmatprep.subr.bf16.mxu0 0
    %617 = vmatpush1.bf16.msra.mxu0 0
    %618 = vmatprep.subr.bf16.mxu0 0
    %619 = vmatpush1.bf16.msra.mxu0 0
    %620 = vmatprep.subr.bf16.mxu0 0
    %621 = vmatpush1.bf16.msra.mxu0 %v604
    %622 = vmatprep.subr.bf16.mxu0 0
    %623 = vmatpush2.bf16.msra.mxu0 0
    %624 = vmatprep.subr.bf16.mxu0 0
    %625 = vmatpush2.bf16.msra.mxu0 0
    %626 = vmatprep.subr.bf16.mxu0 0
    %627 = vmatpush2.bf16.msra.mxu0 0
    %628 = vmatprep.subr.bf16.mxu0 0
    %629 = vmatpush2.bf16.msra.mxu0 0
    %630 = vmatprep.subr.bf16.mxu0 0
    %631 = vmatpush2.bf16.msra.mxu0 0
    %632 = vmatprep.subr.bf16.mxu0 0
    %633 = vmatpush2.bf16.msra.mxu0 0
    %634 = vmatprep.subr.bf16.mxu0 0
    %635 = vmatpush2.bf16.msra.mxu0 0
    %636 = vmatprep.subr.bf16.mxu0 0
    %637 = vmatpush2.bf16.msra.mxu0 0
    %638 = vmatprep.mubr.bf16.mxu0 0
    %639 = vmatmul.mubr.bf16.gmra.mxu0 %v601
    %v640 = vpop.f32.mrf.mxu0
    %v641 = vadd.f32 0.0, %v640
    %v642 = vpop.f32.mrf.mxu0
    %v643 = vpop.f32.mrf.mxu0
    %v644 = vpop.f32.mrf.mxu0
    %645 = vdwg.mxu0
    %v646 = vpack.c.bf16 %v593, %v593
    %v647 = vpack.c.bf16 %v641, %v641
    %650 = vrot.lane.b32.xlu0 %v646, 8
    %v651 = vpop.permute.xlu0 %650
    %652 = vrot.lane.b32.xlu0 %v647, 8
    %v653 = vpop.permute.xlu0 %652
    %vm656 = vcmask 126016
    %657 = vst.msk [vmem:[#allocation2] sm:$0xf] %vm656, %v651
    %658 = vst.msk [vmem:[#allocation2 + $0x4] sm:$0xf] %vm656, %v653
    %659 = vrot.lane.b32.xlu0 %v189, 112
    %v660 = vpop.permute.xlu0 %659
    %661 = vrot.lane.b32.xlu0 %v189, 80
    %v662 = vpop.permute.xlu0 %661
    %v664 = vsel %vm205, %v660, 0
    %v667 = vsel %vm205, %v662, 0
    %669 = vmatprep.subr.bf16.mxu0 0
    %670 = vmatpush1.bf16.xpose.msra.mxu0 0
    %671 = vmatprep.subr.bf16.mxu0 0
    %672 = vmatpush1.bf16.xpose.msra.mxu0 0
    %673 = vmatprep.subr.bf16.mxu0 0
    %674 = vmatpush1.bf16.xpose.msra.mxu0 0
    %675 = vmatprep.subr.bf16.mxu0 0
    %676 = vmatpush1.bf16.xpose.msra.mxu0 0
    %677 = vmatprep.subr.bf16.mxu0 0
    %678 = vmatpush1.bf16.xpose.msra.mxu0 0
    %679 = vmatprep.subr.bf16.mxu0 0
    %680 = vmatpush1.bf16.xpose.msra.mxu0 0
    %681 = vmatprep.subr.bf16.mxu0 0
    %682 = vmatpush1.bf16.xpose.msra.mxu0 0
    %683 = vmatprep.subr.bf16.mxu0 0
    %684 = vmatpush1.bf16.xpose.msra.mxu0 %v667
    %685 = vmatprep.subr.bf16.mxu0 0
    %686 = vmatpush2.bf16.xpose.msra.mxu0 0
    %687 = vmatprep.subr.bf16.mxu0 0
    %688 = vmatpush2.bf16.xpose.msra.mxu0 0
    %689 = vmatprep.subr.bf16.mxu0 0
    %690 = vmatpush2.bf16.xpose.msra.mxu0 0
    %691 = vmatprep.subr.bf16.mxu0 0
    %692 = vmatpush2.bf16.xpose.msra.mxu0 0
    %693 = vmatprep.subr.bf16.mxu0 0
    %694 = vmatpush2.bf16.xpose.msra.mxu0 0
    %695 = vmatprep.subr.bf16.mxu0 0
    %696 = vmatpush2.bf16.xpose.msra.mxu0 0
    %697 = vmatprep.subr.bf16.mxu0 0
    %698 = vmatpush2.bf16.xpose.msra.mxu0 0
    %699 = vmatprep.subr.bf16.mxu0 0
    %700 = vmatpush2.bf16.xpose.msra.mxu0 0
    %701 = vmatprep.mubr.bf16.mxu0 0
    %702 = vmatmul.mubr.bf16.gmra.mxu0 %v664
    %v703 = vpop.f32.mrf.mxu0
    %v704 = vadd.f32 %v196, %v703
    %v705 = vpop.f32.mrf.mxu0
    %v706 = vpop.f32.mrf.mxu0
    %v707 = vpop.f32.mrf.mxu0
    %708 = vdwg.mxu0
    %709 = vrot.lane.b32.xlu0 %v190, 112
    %v710 = vpop.permute.xlu0 %709
    %711 = vrot.lane.b32.xlu0 %v190, 80
    %v712 = vpop.permute.xlu0 %711
    %v714 = vsel %vm205, %v710, 0
    %v717 = vsel %vm205, %v712, 0
    %719 = vmatprep.subr.bf16.mxu0 0
    %720 = vmatpush1.bf16.xpose.msra.mxu0 0
    %721 = vmatprep.subr.bf16.mxu0 0
    %722 = vmatpush1.bf16.xpose.msra.mxu0 0
    %723 = vmatprep.subr.bf16.mxu0 0
    %724 = vmatpush1.bf16.xpose.msra.mxu0 0
    %725 = vmatprep.subr.bf16.mxu0 0
    %726 = vmatpush1.bf16.xpose.msra.mxu0 0
    %727 = vmatprep.subr.bf16.mxu0 0
    %728 = vmatpush1.bf16.xpose.msra.mxu0 0
    %729 = vmatprep.subr.bf16.mxu0 0
    %730 = vmatpush1.bf16.xpose.msra.mxu0 0
    %731 = vmatprep.subr.bf16.mxu0 0
    %732 = vmatpush1.bf16.xpose.msra.mxu0 0
    %733 = vmatprep.subr.bf16.mxu0 0
    %734 = vmatpush1.bf16.xpose.msra.mxu0 %v717
    %735 = vmatprep.subr.bf16.mxu0 0
    %736 = vmatpush2.bf16.xpose.msra.mxu0 0
    %737 = vmatprep.subr.bf16.mxu0 0
    %738 = vmatpush2.bf16.xpose.msra.mxu0 0
    %739 = vmatprep.subr.bf16.mxu0 0
    %740 = vmatpush2.bf16.xpose.msra.mxu0 0
    %741 = vmatprep.subr.bf16.mxu0 0
    %742 = vmatpush2.bf16.xpose.msra.mxu0 0
    %743 = vmatprep.subr.bf16.mxu0 0
    %744 = vmatpush2.bf16.xpose.msra.mxu0 0
    %745 = vmatprep.subr.bf16.mxu0 0
    %746 = vmatpush2.bf16.xpose.msra.mxu0 0
    %747 = vmatprep.subr.bf16.mxu0 0
    %748 = vmatpush2.bf16.xpose.msra.mxu0 0
    %749 = vmatprep.subr.bf16.mxu0 0
    %750 = vmatpush2.bf16.xpose.msra.mxu0 0
    %751 = vmatprep.mubr.bf16.mxu0 0
    %752 = vmatmul.mubr.bf16.gmra.mxu0 %v714
    %v753 = vpop.f32.mrf.mxu0
    %v754 = vadd.f32 %v200, %v753
    %v755 = vpop.f32.mrf.mxu0
    %v756 = vpop.f32.mrf.mxu0
    %v757 = vpop.f32.mrf.mxu0
    %758 = vdwg.mxu0
    %v759 = vsel %vm205, %v704, -inf
    %760 = vmax.xlane.f32.xlu0 %v759
    %v761 = vpop.xlane.xlu0 %760
    %v762 = vsel %vm205, %v754, -inf
    %763 = vmax.xlane.f32.xlu0 %v762
    %v764 = vpop.xlane.xlu0 %763
    %v765 = vsub.f32 %v704, %v761
    %v766 = vsub.f32 %v754, %v764
    %v767 = vmul.f32 %v765, 1.442695
    %v768 = vpow.pop %v767
    %v769 = vmul.f32 %v766, 1.442695
    %v770 = vpow.pop %v769
    %v771 = vsel %vm205, %v768, 0.0
    %772 = vadd.xlane.f32.xlu0 %v771
    %v773 = vpop.xlane.xlu0 %772
    %v774 = vsel %vm205, %v770, 0.0
    %775 = vadd.xlane.f32.xlu0 %v774
    %v776 = vpop.xlane.xlu0 %775
    %v777 = vrcp.pop %v773
    %v778 = vrcp.pop %v776
    %v779 = vmul.f32 %v768, %v777
    %v780 = vmul.f32 %v770, %v778
    %v781 = vpack.c.bf16 %v779, %v779
    %v782 = vpack.c.bf16 %v780, %v780
    %783 = vrot.lane.b32.xlu0 %v189, 48
    %v784 = vpop.permute.xlu0 %783
    %v786 = vsel %vm205, %v781, 0
    %v789 = vsel %vm329, %v784, 0
    %791 = vmatprep.subr.bf16.mxu0 0
    %792 = vmatpush1.bf16.msra.mxu0 0
    %793 = vmatprep.subr.bf16.mxu0 0
    %794 = vmatpush1.bf16.msra.mxu0 0
    %795 = vmatprep.subr.bf16.mxu0 0
    %796 = vmatpush1.bf16.msra.mxu0 0
    %797 = vmatprep.subr.bf16.mxu0 0
    %798 = vmatpush1.bf16.msra.mxu0 0
    %799 = vmatprep.subr.bf16.mxu0 0
    %800 = vmatpush1.bf16.msra.mxu0 0
    %801 = vmatprep.subr.bf16.mxu0 0
    %802 = vmatpush1.bf16.msra.mxu0 0
    %803 = vmatprep.subr.bf16.mxu0 0
    %804 = vmatpush1.bf16.msra.mxu0 0
    %805 = vmatprep.subr.bf16.mxu0 0
    %806 = vmatpush1.bf16.msra.mxu0 %v789
    %807 = vmatprep.subr.bf16.mxu0 0
    %808 = vmatpush2.bf16.msra.mxu0 0
    %809 = vmatprep.subr.bf16.mxu0 0
    %810 = vmatpush2.bf16.msra.mxu0 0
    %811 = vmatprep.subr.bf16.mxu0 0
    %812 = vmatpush2.bf16.msra.mxu0 0
    %813 = vmatprep.subr.bf16.mxu0 0
    %814 = vmatpush2.bf16.msra.mxu0 0
    %815 = vmatprep.subr.bf16.mxu0 0
    %816 = vmatpush2.bf16.msra.mxu0 0
    %817 = vmatprep.subr.bf16.mxu0 0
    %818 = vmatpush2.bf16.msra.mxu0 0
    %819 = vmatprep.subr.bf16.mxu0 0
    %820 = vmatpush2.bf16.msra.mxu0 0
    %821 = vmatprep.subr.bf16.mxu0 0
    %822 = vmatpush2.bf16.msra.mxu0 0
    %823 = vmatprep.mubr.bf16.mxu0 0
    %824 = vmatmul.mubr.bf16.gmra.mxu0 %v786
    %v825 = vpop.f32.mrf.mxu0
    %v826 = vadd.f32 0.0, %v825
    %v827 = vpop.f32.mrf.mxu0
    %v828 = vpop.f32.mrf.mxu0
    %v829 = vpop.f32.mrf.mxu0
    %830 = vdwg.mxu0
    %831 = vrot.lane.b32.xlu0 %v190, 48
    %v832 = vpop.permute.xlu0 %831
    %v834 = vsel %vm205, %v782, 0
    %v837 = vsel %vm329, %v832, 0
    %839 = vmatprep.subr.bf16.mxu0 0
    %840 = vmatpush1.bf16.msra.mxu0 0
    %841 = vmatprep.subr.bf16.mxu0 0
    %842 = vmatpush1.bf16.msra.mxu0 0
    %843 = vmatprep.subr.bf16.mxu0 0
    %844 = vmatpush1.bf16.msra.mxu0 0
    %845 = vmatprep.subr.bf16.mxu0 0
    %846 = vmatpush1.bf16.msra.mxu0 0
    %847 = vmatprep.subr.bf16.mxu0 0
    %848 = vmatpush1.bf16.msra.mxu0 0
    %849 = vmatprep.subr.bf16.mxu0 0
    %850 = vmatpush1.bf16.msra.mxu0 0
    %851 = vmatprep.subr.bf16.mxu0 0
    %852 = vmatpush1.bf16.msra.mxu0 0
    %853 = vmatprep.subr.bf16.mxu0 0
    %854 = vmatpush1.bf16.msra.mxu0 %v837
    %855 = vmatprep.subr.bf16.mxu0 0
    %856 = vmatpush2.bf16.msra.mxu0 0
    %857 = vmatprep.subr.bf16.mxu0 0
    %858 = vmatpush2.bf16.msra.mxu0 0
    %859 = vmatprep.subr.bf16.mxu0 0
    %860 = vmatpush2.bf16.msra.mxu0 0
    %861 = vmatprep.subr.bf16.mxu0 0
    %862 = vmatpush2.bf16.msra.mxu0 0
    %863 = vmatprep.subr.bf16.mxu0 0
    %864 = vmatpush2.bf16.msra.mxu0 0
    %865 = vmatprep.subr.bf16.mxu0 0
    %866 = vmatpush2.bf16.msra.mxu0 0
    %867 = vmatprep.subr.bf16.mxu0 0
    %868 = vmatpush2.bf16.msra.mxu0 0
    %869 = vmatprep.subr.bf16.mxu0 0
    %870 = vmatpush2.bf16.msra.mxu0 0
    %871 = vmatprep.mubr.bf16.mxu0 0
    %872 = vmatmul.mubr.bf16.gmra.mxu0 %v834
    %v873 = vpop.f32.mrf.mxu0
    %v874 = vadd.f32 0.0, %v873
    %v875 = vpop.f32.mrf.mxu0
    %v876 = vpop.f32.mrf.mxu0
    %v877 = vpop.f32.mrf.mxu0
    %878 = vdwg.mxu0
    %v879 = vpack.c.bf16 %v826, %v826
    %v880 = vpack.c.bf16 %v874, %v874
    %883 = vrot.lane.b32.xlu0 %v879, 16
    %v884 = vpop.permute.xlu0 %883
    %885 = vrot.lane.b32.xlu0 %v880, 16
    %v886 = vpop.permute.xlu0 %885
    %vm889 = vcmask 191616
    %890 = vst.msk [vmem:[#allocation2] sm:$0xf] %vm889, %v884
    %891 = vst.msk [vmem:[#allocation2 + $0x4] sm:$0xf] %vm889, %v886
    %892 = vrot.lane.b32.xlu0 %v189, 104
    %v893 = vpop.permute.xlu0 %892
    %894 = vrot.lane.b32.xlu0 %v189, 72
    %v895 = vpop.permute.xlu0 %894
    %v897 = vsel %vm205, %v893, 0
    %v900 = vsel %vm205, %v895, 0
    %902 = vmatprep.subr.bf16.mxu0 0
    %903 = vmatpush1.bf16.xpose.msra.mxu0 0
    %904 = vmatprep.subr.bf16.mxu0 0
    %905 = vmatpush1.bf16.xpose.msra.mxu0 0
    %906 = vmatprep.subr.bf16.mxu0 0
    %907 = vmatpush1.bf16.xpose.msra.mxu0 0
    %908 = vmatprep.subr.bf16.mxu0 0
    %909 = vmatpush1.bf16.xpose.msra.mxu0 0
    %910 = vmatprep.subr.bf16.mxu0 0
    %911 = vmatpush1.bf16.xpose.msra.mxu0 0
    %912 = vmatprep.subr.bf16.mxu0 0
    %913 = vmatpush1.bf16.xpose.msra.mxu0 0
    %914 = vmatprep.subr.bf16.mxu0 0
    %915 = vmatpush1.bf16.xpose.msra.mxu0 0
    %916 = vmatprep.subr.bf16.mxu0 0
    %917 = vmatpush1.bf16.xpose.msra.mxu0 %v900
    %918 = vmatprep.subr.bf16.mxu0 0
    %919 = vmatpush2.bf16.xpose.msra.mxu0 0
    %920 = vmatprep.subr.bf16.mxu0 0
    %921 = vmatpush2.bf16.xpose.msra.mxu0 0
    %922 = vmatprep.subr.bf16.mxu0 0
    %923 = vmatpush2.bf16.xpose.msra.mxu0 0
    %924 = vmatprep.subr.bf16.mxu0 0
    %925 = vmatpush2.bf16.xpose.msra.mxu0 0
    %926 = vmatprep.subr.bf16.mxu0 0
    %927 = vmatpush2.bf16.xpose.msra.mxu0 0
    %928 = vmatprep.subr.bf16.mxu0 0
    %929 = vmatpush2.bf16.xpose.msra.mxu0 0
    %930 = vmatprep.subr.bf16.mxu0 0
    %931 = vmatpush2.bf16.xpose.msra.mxu0 0
    %932 = vmatprep.subr.bf16.mxu0 0
    %933 = vmatpush2.bf16.xpose.msra.mxu0 0
    %934 = vmatprep.mubr.bf16.mxu0 0
    %935 = vmatmul.mubr.bf16.gmra.mxu0 %v897
    %v936 = vpop.f32.mrf.mxu0
    %v937 = vadd.f32 %v196, %v936
    %v938 = vpop.f32.mrf.mxu0
    %v939 = vpop.f32.mrf.mxu0
    %v940 = vpop.f32.mrf.mxu0
    %941 = vdwg.mxu0
    %942 = vrot.lane.b32.xlu0 %v190, 104
    %v943 = vpop.permute.xlu0 %942
    %944 = vrot.lane.b32.xlu0 %v190, 72
    %v945 = vpop.permute.xlu0 %944
    %v947 = vsel %vm205, %v943, 0
    %v950 = vsel %vm205, %v945, 0
    %952 = vmatprep.subr.bf16.mxu0 0
    %953 = vmatpush1.bf16.xpose.msra.mxu0 0
    %954 = vmatprep.subr.bf16.mxu0 0
    %955 = vmatpush1.bf16.xpose.msra.mxu0 0
    %956 = vmatprep.subr.bf16.mxu0 0
    %957 = vmatpush1.bf16.xpose.msra.mxu0 0
    %958 = vmatprep.subr.bf16.mxu0 0
    %959 = vmatpush1.bf16.xpose.msra.mxu0 0
    %960 = vmatprep.subr.bf16.mxu0 0
    %961 = vmatpush1.bf16.xpose.msra.mxu0 0
    %962 = vmatprep.subr.bf16.mxu0 0
    %963 = vmatpush1.bf16.xpose.msra.mxu0 0
    %964 = vmatprep.subr.bf16.mxu0 0
    %965 = vmatpush1.bf16.xpose.msra.mxu0 0
    %966 = vmatprep.subr.bf16.mxu0 0
    %967 = vmatpush1.bf16.xpose.msra.mxu0 %v950
    %968 = vmatprep.subr.bf16.mxu0 0
    %969 = vmatpush2.bf16.xpose.msra.mxu0 0
    %970 = vmatprep.subr.bf16.mxu0 0
    %971 = vmatpush2.bf16.xpose.msra.mxu0 0
    %972 = vmatprep.subr.bf16.mxu0 0
    %973 = vmatpush2.bf16.xpose.msra.mxu0 0
    %974 = vmatprep.subr.bf16.mxu0 0
    %975 = vmatpush2.bf16.xpose.msra.mxu0 0
    %976 = vmatprep.subr.bf16.mxu0 0
    %977 = vmatpush2.bf16.xpose.msra.mxu0 0
    %978 = vmatprep.subr.bf16.mxu0 0
    %979 = vmatpush2.bf16.xpose.msra.mxu0 0
    %980 = vmatprep.subr.bf16.mxu0 0
    %981 = vmatpush2.bf16.xpose.msra.mxu0 0
    %982 = vmatprep.subr.bf16.mxu0 0
    %983 = vmatpush2.bf16.xpose.msra.mxu0 0
    %984 = vmatprep.mubr.bf16.mxu0 0
    %985 = vmatmul.mubr.bf16.gmra.mxu0 %v947
    %v986 = vpop.f32.mrf.mxu0
    %v987 = vadd.f32 %v200, %v986
    %v988 = vpop.f32.mrf.mxu0
    %v989 = vpop.f32.mrf.mxu0
    %v990 = vpop.f32.mrf.mxu0
    %991 = vdwg.mxu0
    %v992 = vsel %vm205, %v937, -inf
    %993 = vmax.xlane.f32.xlu0 %v992
    %v994 = vpop.xlane.xlu0 %993
    %v995 = vsel %vm205, %v987, -inf
    %996 = vmax.xlane.f32.xlu0 %v995
    %v997 = vpop.xlane.xlu0 %996
    %v998 = vsub.f32 %v937, %v994
    %v999 = vsub.f32 %v987, %v997
    %v1000 = vmul.f32 %v998, 1.442695
    %v1001 = vpow.pop %v1000
    %v1002 = vmul.f32 %v999, 1.442695
    %v1003 = vpow.pop %v1002
    %v1004 = vsel %vm205, %v1001, 0.0
    %1005 = vadd.xlane.f32.xlu0 %v1004
    %v1006 = vpop.xlane.xlu0 %1005
    %v1007 = vsel %vm205, %v1003, 0.0
    %1008 = vadd.xlane.f32.xlu0 %v1007
    %v1009 = vpop.xlane.xlu0 %1008
    %v1010 = vrcp.pop %v1006
    %v1011 = vrcp.pop %v1009
    %v1012 = vmul.f32 %v1001, %v1010
    %v1013 = vmul.f32 %v1003, %v1011
    %v1014 = vpack.c.bf16 %v1012, %v1012
    %v1015 = vpack.c.bf16 %v1013, %v1013
    %1016 = vrot.lane.b32.xlu0 %v189, 40
    %v1017 = vpop.permute.xlu0 %1016
    %v1019 = vsel %vm205, %v1014, 0
    %v1022 = vsel %vm329, %v1017, 0
    %1024 = vmatprep.subr.bf16.mxu0 0
    %1025 = vmatpush1.bf16.msra.mxu0 0
    %1026 = vmatprep.subr.bf16.mxu0 0
    %1027 = vmatpush1.bf16.msra.mxu0 0
    %1028 = vmatprep.subr.bf16.mxu0 0
    %1029 = vmatpush1.bf16.msra.mxu0 0
    %1030 = vmatprep.subr.bf16.mxu0 0
    %1031 = vmatpush1.bf16.msra.mxu0 0
    %1032 = vmatprep.subr.bf16.mxu0 0
    %1033 = vmatpush1.bf16.msra.mxu0 0
    %1034 = vmatprep.subr.bf16.mxu0 0
    %1035 = vmatpush1.bf16.msra.mxu0 0
    %1036 = vmatprep.subr.bf16.mxu0 0
    %1037 = vmatpush1.bf16.msra.mxu0 0
    %1038 = vmatprep.subr.bf16.mxu0 0
    %1039 = vmatpush1.bf16.msra.mxu0 %v1022
    %1040 = vmatprep.subr.bf16.mxu0 0
    %1041 = vmatpush2.bf16.msra.mxu0 0
    %1042 = vmatprep.subr.bf16.mxu0 0
    %1043 = vmatpush2.bf16.msra.mxu0 0
    %1044 = vmatprep.subr.bf16.mxu0 0
    %1045 = vmatpush2.bf16.msra.mxu0 0
    %1046 = vmatprep.subr.bf16.mxu0 0
    %1047 = vmatpush2.bf16.msra.mxu0 0
    %1048 = vmatprep.subr.bf16.mxu0 0
    %1049 = vmatpush2.bf16.msra.mxu0 0
    %1050 = vmatprep.subr.bf16.mxu0 0
    %1051 = vmatpush2.bf16.msra.mxu0 0
    %1052 = vmatprep.subr.bf16.mxu0 0
    %1053 = vmatpush2.bf16.msra.mxu0 0
    %1054 = vmatprep.subr.bf16.mxu0 0
    %1055 = vmatpush2.bf16.msra.mxu0 0
    %1056 = vmatprep.mubr.bf16.mxu0 0
    %1057 = vmatmul.mubr.bf16.gmra.mxu0 %v1019
    %v1058 = vpop.f32.mrf.mxu0
    %v1059 = vadd.f32 0.0, %v1058
    %v1060 = vpop.f32.mrf.mxu0
    %v1061 = vpop.f32.mrf.mxu0
    %v1062 = vpop.f32.mrf.mxu0
    %1063 = vdwg.mxu0
    %1064 = vrot.lane.b32.xlu0 %v190, 40
    %v1065 = vpop.permute.xlu0 %1064
    %v1067 = vsel %vm205, %v1015, 0
    %v1070 = vsel %vm329, %v1065, 0
    %1072 = vmatprep.subr.bf16.mxu0 0
    %1073 = vmatpush1.bf16.msra.mxu0 0
    %1074 = vmatprep.subr.bf16.mxu0 0
    %1075 = vmatpush1.bf16.msra.mxu0 0
    %1076 = vmatprep.subr.bf16.mxu0 0
    %1077 = vmatpush1.bf16.msra.mxu0 0
    %1078 = vmatprep.subr.bf16.mxu0 0
    %1079 = vmatpush1.bf16.msra.mxu0 0
    %1080 = vmatprep.subr.bf16.mxu0 0
    %1081 = vmatpush1.bf16.msra.mxu0 0
    %1082 = vmatprep.subr.bf16.mxu0 0
    %1083 = vmatpush1.bf16.msra.mxu0 0
    %1084 = vmatprep.subr.bf16.mxu0 0
    %1085 = vmatpush1.bf16.msra.mxu0 0
    %1086 = vmatprep.subr.bf16.mxu0 0
    %1087 = vmatpush1.bf16.msra.mxu0 %v1070
    %1088 = vmatprep.subr.bf16.mxu0 0
    %1089 = vmatpush2.bf16.msra.mxu0 0
    %1090 = vmatprep.subr.bf16.mxu0 0
    %1091 = vmatpush2.bf16.msra.mxu0 0
    %1092 = vmatprep.subr.bf16.mxu0 0
    %1093 = vmatpush2.bf16.msra.mxu0 0
    %1094 = vmatprep.subr.bf16.mxu0 0
    %1095 = vmatpush2.bf16.msra.mxu0 0
    %1096 = vmatprep.subr.bf16.mxu0 0
    %1097 = vmatpush2.bf16.msra.mxu0 0
    %1098 = vmatprep.subr.bf16.mxu0 0
    %1099 = vmatpush2.bf16.msra.mxu0 0
    %1100 = vmatprep.subr.bf16.mxu0 0
    %1101 = vmatpush2.bf16.msra.mxu0 0
    %1102 = vmatprep.subr.bf16.mxu0 0
    %1103 = vmatpush2.bf16.msra.mxu0 0
    %1104 = vmatprep.mubr.bf16.mxu0 0
    %1105 = vmatmul.mubr.bf16.gmra.mxu0 %v1067
    %v1106 = vpop.f32.mrf.mxu0
    %v1107 = vadd.f32 0.0, %v1106
    %v1108 = vpop.f32.mrf.mxu0
    %v1109 = vpop.f32.mrf.mxu0
    %v1110 = vpop.f32.mrf.mxu0
    %1111 = vdwg.mxu0
    %v1112 = vpack.c.bf16 %v1059, %v1059
    %v1113 = vpack.c.bf16 %v1107, %v1107
    %1116 = vrot.lane.b32.xlu0 %v1112, 24
    %v1117 = vpop.permute.xlu0 %1116
    %1118 = vrot.lane.b32.xlu0 %v1113, 24
    %v1119 = vpop.permute.xlu0 %1118
    %vm1122 = vcmask 257216
    %1123 = vst.msk [vmem:[#allocation2] sm:$0xf] %vm1122, %v1117
    %1124 = vst.msk [vmem:[#allocation2 + $0x4] sm:$0xf] %vm1122, %v1119
    %v1125 = vld [vmem:[#allocation2] sm:$0xf]
    %v1126 = vld [vmem:[#allocation2 + $0x4] sm:$0xf]
    %v1127 = vld [vmem:[%s5] sm:$0xf]
    %v1128 = vld [vmem:[%s5 + $0x4] sm:$0xf]
    %v1129 = vld [vmem:[%s5 + $0x8] sm:$0xf]
    %v1130 = vld [vmem:[%s5 + $0xc] sm:$0xf]
    %v1131 = vld [vmem:[#allocation8] sm:$0x1]
    %v1133 = vlaneseq
    %v1134 = vshrl.u32 %v1133, 7
    %v1135 = vsub.s32 0, %v1134
    %v1136 = vrot.slane %v1131, %v1135
    %v1140 = vunpack.c.l.b16 %v1125
    %v1141 = vunpack.c.l.b16 %v1126
    %v1142 = vpack.c.b16 %v1141, %v1140
    %v1147 = vunpack.c.l.b16 %v1127
    %v1148 = vunpack.c.l.b16 %v1128
    %v1149 = vunpack.c.l.b16 %v1129
    %v1150 = vunpack.c.l.b16 %v1130
    %v1151 = vpack.c.b16 %v1148, %v1147
    %v1152 = vpack.c.b16 %v1150, %v1149
    %v1156 = vsel %vm138, %v1142, 0
    %1158 = vmatprep.subr.bf16.mxu0 0
    %1159 = vmatpush1.bf16.msra.mxu0 0
    %1160 = vmatprep.subr.bf16.mxu0 0
    %1161 = vmatpush1.bf16.msra.mxu0 0
    %1162 = vmatprep.subr.bf16.mxu0 0
    %1163 = vmatpush1.bf16.msra.mxu0 0
    %1164 = vmatprep.subr.bf16.mxu0 0
    %1165 = vmatpush1.bf16.msra.mxu0 0
    %1166 = vmatprep.subr.bf16.mxu0 0
    %1167 = vmatpush1.bf16.msra.mxu0 0
    %1168 = vmatprep.subr.bf16.mxu0 0
    %1169 = vmatpush1.bf16.msra.mxu0 0
    %1170 = vmatprep.subr.bf16.mxu0 0
    %1171 = vmatpush1.bf16.msra.mxu0 %v1152
    %1172 = vmatprep.subr.bf16.mxu0 0
    %1173 = vmatpush1.bf16.msra.mxu0 %v1151
    %1174 = vmatprep.subr.bf16.mxu0 0
    %1175 = vmatpush2.bf16.msra.mxu0 0
    %1176 = vmatprep.subr.bf16.mxu0 0
    %1177 = vmatpush2.bf16.msra.mxu0 0
    %1178 = vmatprep.subr.bf16.mxu0 0
    %1179 = vmatpush2.bf16.msra.mxu0 0
    %1180 = vmatprep.subr.bf16.mxu0 0
    %1181 = vmatpush2.bf16.msra.mxu0 0
    %1182 = vmatprep.subr.bf16.mxu0 0
    %1183 = vmatpush2.bf16.msra.mxu0 0
    %1184 = vmatprep.subr.bf16.mxu0 0
    %1185 = vmatpush2.bf16.msra.mxu0 0
    %1186 = vmatprep.subr.bf16.mxu0 0
    %1187 = vmatpush2.bf16.msra.mxu0 0
    %1188 = vmatprep.subr.bf16.mxu0 0
    %1189 = vmatpush2.bf16.msra.mxu0 0
    %1190 = vmatprep.mubr.bf16.mxu0 0
    %1191 = vmatmul.mubr.bf16.gmra.mxu0 %v1156
    %v1192 = vpop.f32.mrf.mxu0
    %v1193 = vadd.f32 %v1136, %v1192
    %v1194 = vpop.f32.mrf.mxu0
    %v1195 = vpop.f32.mrf.mxu0
    %v1196 = vadd.f32 %v1136, %v1195
    %v1197 = vpop.f32.mrf.mxu0
    %1198 = vdwg.mxu0
    %v1199 = vadd.f32 %v112, %v1193
    %v1200 = vadd.f32 %v113, %v1196
    %v1201 = vsel %vm138, %v1199, 0.0
    %1202 = vadd.xlane.f32.xlu0 %v1201
    %v1203 = vpop.xlane.xlu0 %1202
    %v1204 = vsel %vm138, %v1200, 0.0
    %1205 = vadd.xlane.f32.xlu0 %v1204
    %v1206 = vpop.xlane.xlu0 %1205
    %v1207 = vrcp.pop 32.0
    %v1208 = vmul.f32 %v1203, %v1207
    %v1209 = vmul.f32 %v1206, %v1207
    %v1210 = vsub.f32 %v1199, %v1208
    %v1211 = vsub.f32 %v1200, %v1209
    %v1212 = vmul.f32 %v1210, %v1210
    %v1213 = vmul.f32 %v1211, %v1211
    %v1214 = vsel %vm138, %v1212, 0.0
    %1215 = vadd.xlane.f32.xlu0 %v1214
    %v1216 = vpop.xlane.xlu0 %1215
    %v1217 = vsel %vm138, %v1213, 0.0
    %1218 = vadd.xlane.f32.xlu0 %v1217
    %v1219 = vpop.xlane.xlu0 %1218
    %v1220 = vmul.f32 %v1216, %v1207
    %v1221 = vmul.f32 %v1219, %v1207
    %v1222 = vadd.f32 %v1220, 1e-06
    %v1223 = vadd.f32 %v1221, 1e-06
    %v1224 = vrsqrt.pop %v1222
    %v1225 = vrsqrt.pop %v1223
    %v1226 = vmul.f32 %v1210, %v1224
    %v1227 = vmul.f32 %v1211, %v1225
    %v1228 = vld [vmem:[#allocation9] sm:$0x1]
    %v1230 = vlaneseq
    %v1231 = vshrl.u32 %v1230, 7
    %v1232 = vsub.s32 0, %v1231
    %v1233 = vrot.slane %v1228, %v1232
    %v1235 = vmul.f32 %v1226, %v1233
    %v1236 = vmul.f32 %v1227, %v1233
    %v1237 = vld [vmem:[#allocation11] sm:$0x1]
    %v1239 = vlaneseq
    %v1240 = vshrl.u32 %v1239, 7
    %v1241 = vsub.s32 0, %v1240
    %v1242 = vrot.slane %v1237, %v1241
    %v1244 = vadd.f32 %v1235, %v1242
    %v1245 = vadd.f32 %v1236, %v1242
    %v1246 = vpack.c.bf16 %v1245, %v1244
    %v1247 = vld [vmem:[%s9] sm:$0xf]
    %v1248 = vld [vmem:[%s9 + $0x4] sm:$0xf]
    %v1249 = vld [vmem:[%s9 + $0x8] sm:$0xf]
    %v1250 = vld [vmem:[%s9 + $0xc] sm:$0xf]
    %v1251 = vld [vmem:[%s10] sm:$0x1]
    %v1253 = vlaneseq
    %v1254 = vshrl.u32 %v1253, 7
    %v1255 = vsub.s32 0, %v1254
    %v1256 = vrot.slane %v1251, %v1255
    %v1262 = vunpack.c.l.b16 %v1247
    %v1263 = vunpack.c.l.b16 %v1248
    %v1264 = vunpack.c.l.b16 %v1249
    %v1265 = vunpack.c.l.b16 %v1250
    %v1266 = vpack.c.b16 %v1263, %v1262
    %v1267 = vpack.c.b16 %v1265, %v1264
    %v1271 = vsel %vm138, %v1246, 0
    %1273 = vmatprep.subr.bf16.mxu0 0
    %1274 = vmatpush1.bf16.msra.mxu0 0
    %1275 = vmatprep.subr.bf16.mxu0 0
    %1276 = vmatpush1.bf16.msra.mxu0 0
    %1277 = vmatprep.subr.bf16.mxu0 0
    %1278 = vmatpush1.bf16.msra.mxu0 0
    %1279 = vmatprep.subr.bf16.mxu0 0
    %1280 = vmatpush1.bf16.msra.mxu0 0
    %1281 = vmatprep.subr.bf16.mxu0 0
    %1282 = vmatpush1.bf16.msra.mxu0 0
    %1283 = vmatprep.subr.bf16.mxu0 0
    %1284 = vmatpush1.bf16.msra.mxu0 0
    %1285 = vmatprep.subr.bf16.mxu0 0
    %1286 = vmatpush1.bf16.msra.mxu0 %v1267
    %1287 = vmatprep.subr.bf16.mxu0 0
    %1288 = vmatpush1.bf16.msra.mxu0 %v1266
    %1289 = vmatprep.subr.bf16.mxu0 0
    %1290 = vmatpush2.bf16.msra.mxu0 0
    %1291 = vmatprep.subr.bf16.mxu0 0
    %1292 = vmatpush2.bf16.msra.mxu0 0
    %1293 = vmatprep.subr.bf16.mxu0 0
    %1294 = vmatpush2.bf16.msra.mxu0 0
    %1295 = vmatprep.subr.bf16.mxu0 0
    %1296 = vmatpush2.bf16.msra.mxu0 0
    %1297 = vmatprep.subr.bf16.mxu0 0
    %1298 = vmatpush2.bf16.msra.mxu0 0
    %1299 = vmatprep.subr.bf16.mxu0 0
    %1300 = vmatpush2.bf16.msra.mxu0 0
    %1301 = vmatprep.subr.bf16.mxu0 0
    %1302 = vmatpush2.bf16.msra.mxu0 0
    %1303 = vmatprep.subr.bf16.mxu0 0
    %1304 = vmatpush2.bf16.msra.mxu0 0
    %1305 = vmatprep.mubr.bf16.mxu0 0
    %1306 = vmatmul.mubr.bf16.gmra.mxu0 %v1271
    %v1307 = vpop.f32.mrf.mxu0
    %v1308 = vadd.f32 %v1256, %v1307
    %v1309 = vpop.f32.mrf.mxu0
    %v1310 = vpop.f32.mrf.mxu0
    %v1311 = vadd.f32 %v1256, %v1310
    %v1312 = vpop.f32.mrf.mxu0
    %1313 = vdwg.mxu0
    %v1314 = vmax.f32 %v1308, 0.0
    %v1315 = vmax.f32 %v1311, 0.0
    %v1316 = vpack.c.bf16 %v1315, %v1314
    %v1317 = vld [vmem:[%s11] sm:$0xf]
    %v1318 = vld [vmem:[%s11 + $0x4] sm:$0xf]
    %v1319 = vld [vmem:[%s11 + $0x8] sm:$0xf]
    %v1320 = vld [vmem:[%s11 + $0xc] sm:$0xf]
    %v1321 = vld [vmem:[%s11 + $0x10] sm:$0xf]
    %v1322 = vld [vmem:[%s11 + $0x14] sm:$0xf]
    %v1323 = vld [vmem:[%s11 + $0x18] sm:$0xf]
    %v1324 = vld [vmem:[%s11 + $0x1c] sm:$0xf]
    %v1325 = vld [vmem:[%s12] sm:$0x1]
    %v1327 = vlaneseq
    %v1328 = vshrl.u32 %v1327, 7
    %v1329 = vsub.s32 0, %v1328
    %v1330 = vrot.slane %v1325, %v1329
    %v1340 = vunpack.c.l.b16 %v1317
    %v1341 = vunpack.c.l.b16 %v1318
    %v1342 = vunpack.c.l.b16 %v1319
    %v1343 = vunpack.c.l.b16 %v1320
    %v1344 = vunpack.c.l.b16 %v1321
    %v1345 = vunpack.c.l.b16 %v1322
    %v1346 = vunpack.c.l.b16 %v1323
    %v1347 = vunpack.c.l.b16 %v1324
    %v1348 = vpack.c.b16 %v1341, %v1340
    %v1349 = vpack.c.b16 %v1343, %v1342
    %v1350 = vpack.c.b16 %v1345, %v1344
    %v1351 = vpack.c.b16 %v1347, %v1346
    %vm1356 = vcmask 523264
    %v1358 = vsel %vm1356, %v1316, 0
    %1360 = vmatprep.subr.bf16.mxu0 0
    %1361 = vmatpush1.bf16.msra.mxu0 0
    %1362 = vmatprep.subr.bf16.mxu0 0
    %1363 = vmatpush1.bf16.msra.mxu0 0
    %1364 = vmatprep.subr.bf16.mxu0 0
    %1365 = vmatpush1.bf16.msra.mxu0 0
    %1366 = vmatprep.subr.bf16.mxu0 0
    %1367 = vmatpush1.bf16.msra.mxu0 0
    %1368 = vmatprep.subr.bf16.mxu0 0
    %1369 = vmatpush1.bf16.msra.mxu0 %v1351
    %1370 = vmatprep.subr.bf16.mxu0 0
    %1371 = vmatpush1.bf16.msra.mxu0 %v1350
    %1372 = vmatprep.subr.bf16.mxu0 0
    %1373 = vmatpush1.bf16.msra.mxu0 %v1349
    %1374 = vmatprep.subr.bf16.mxu0 0
    %1375 = vmatpush1.bf16.msra.mxu0 %v1348
    %1376 = vmatprep.subr.bf16.mxu0 0
    %1377 = vmatpush2.bf16.msra.mxu0 0
    %1378 = vmatprep.subr.bf16.mxu0 0
    %1379 = vmatpush2.bf16.msra.mxu0 0
    %1380 = vmatprep.subr.bf16.mxu0 0
    %1381 = vmatpush2.bf16.msra.mxu0 0
    %1382 = vmatprep.subr.bf16.mxu0 0
    %1383 = vmatpush2.bf16.msra.mxu0 0
    %1384 = vmatprep.subr.bf16.mxu0 0
    %1385 = vmatpush2.bf16.msra.mxu0 0
    %1386 = vmatprep.subr.bf16.mxu0 0
    %1387 = vmatpush2.bf16.msra.mxu0 0
    %1388 = vmatprep.subr.bf16.mxu0 0
    %1389 = vmatpush2.bf16.msra.mxu0 0
    %1390 = vmatprep.subr.bf16.mxu0 0
    %1391 = vmatpush2.bf16.msra.mxu0 0
    %1392 = vmatprep.mubr.bf16.mxu0 0
    %1393 = vmatmul.mubr.bf16.gmra.mxu0 %v1358
    %v1394 = vpop.f32.mrf.mxu0
    %v1395 = vadd.f32 %v1330, %v1394
    %v1396 = vpop.f32.mrf.mxu0
    %v1397 = vpop.f32.mrf.mxu0
    %v1398 = vadd.f32 %v1330, %v1397
    %v1399 = vpop.f32.mrf.mxu0
    %1400 = vdwg.mxu0
    %v1401 = vadd.f32 %v1244, %v1395
    %v1402 = vadd.f32 %v1245, %v1398
    %v1403 = vsel %vm138, %v1401, 0.0
    %1404 = vadd.xlane.f32.xlu0 %v1403
    %v1405 = vpop.xlane.xlu0 %1404
    %v1406 = vsel %vm138, %v1402, 0.0
    %1407 = vadd.xlane.f32.xlu0 %v1406
    %v1408 = vpop.xlane.xlu0 %1407
    %v1409 = vmul.f32 %v1405, %v1207
    %v1410 = vmul.f32 %v1408, %v1207
    %v1411 = vsub.f32 %v1401, %v1409
    %v1412 = vsub.f32 %v1402, %v1410
    %v1413 = vmul.f32 %v1411, %v1411
    %v1414 = vmul.f32 %v1412, %v1412
    %v1415 = vsel %vm138, %v1413, 0.0
    %1416 = vadd.xlane.f32.xlu0 %v1415
    %v1417 = vpop.xlane.xlu0 %1416
    %v1418 = vsel %vm138, %v1414, 0.0
    %1419 = vadd.xlane.f32.xlu0 %v1418
    %v1420 = vpop.xlane.xlu0 %1419
    %v1421 = vmul.f32 %v1417, %v1207
    %v1422 = vmul.f32 %v1420, %v1207
    %v1423 = vadd.f32 %v1421, 1e-06
    %v1424 = vadd.f32 %v1422, 1e-06
    %v1425 = vrsqrt.pop %v1423
    %v1426 = vrsqrt.pop %v1424
    %v1427 = vmul.f32 %v1411, %v1425
    %v1428 = vmul.f32 %v1412, %v1426
    %v1429 = vld [vmem:[%s13] sm:$0x1]
    %v1431 = vlaneseq
    %v1432 = vshrl.u32 %v1431, 7
    %v1433 = vsub.s32 0, %v1432
    %v1434 = vrot.slane %v1429, %v1433
    %v1436 = vmul.f32 %v1427, %v1434
    %v1437 = vmul.f32 %v1428, %v1434
    %v1438 = vld [vmem:[%s14] sm:$0x1]
    %v1440 = vlaneseq
    %v1441 = vshrl.u32 %v1440, 7
    %v1442 = vsub.s32 0, %v1441
    %v1443 = vrot.slane %v1438, %v1442
    %v1445 = vadd.f32 %v1436, %v1443
    %v1446 = vadd.f32 %v1437, %v1443
    %v1447 = vld [vmem:[%s2] sm:$0xff]
    %v1448 = vld [vmem:[%s2 + $0x8] sm:$0xff]
    %1450 = vset.pattern.permute.xlu0 0
    %1451 = vperm.xlu0 %1450, %v1447
    %v1452 = vpop.permute.xlu0 %1451
    %1455 = vset.pattern.permute.xlu0 0
    %1456 = vperm.xlu0 %1455, %v1448
    %v1457 = vpop.permute.xlu0 %1456
    %v1459 = vmul.f32 %v1445, %v1452
    %v1460 = vmul.f32 %v1446, %v1457
    %1461 = vst.msk [vmem:[#allocation12] sm:$0xff] %vm138, %v1459
    %1462 = vst.msk [vmem:[#allocation12 + $0x8] sm:$0xff] %vm138, %v1460
    // Predicated region
    $region82: #{tpu_custom_call.1} parent=1 // pred_check
      _
    $region83: #{tpu_custom_call.1} parent=1 // pred_check_branch
      %1464 = sbr.rel (0) target = $region85
    $region84: #{tpu_custom_call.1} parent=1 // pred_region
      %s1466 = ssub.s32 256, 256
      %1467 = vsyncadd [#allocation5], %s1466
      %s1468 = sshll.u32 [#allocation12], 4
      %s1469 = int_to_ptr.vmem [resolvable:$true] %s1468
      %1474 = dma.vmem_to_hbm [thread:$0]  %s1469, 256, %s15, [#allocation5], 128, 128, 8
    $region85: #{tpu_custom_call.1} parent=1 // pred_fallthru
      _
    // Predicated region
    $region86: #{tpu_custom_call.1} parent=1 // pred_check
      _
    $region87: #{tpu_custom_call.1} parent=1 // pred_check_branch
      %1476 = sbr.rel (0) target = $region89
    $region88: #{tpu_custom_call.1} parent=1 // pred_region
      %1477 = dma.done [#allocation5], 256
    $region89: #{tpu_custom_call.1} parent=1 // pred_fallthru
      _
    %1478 = vsyncpa [#allocation4], 1
    %1479 = vsyncpa [#allocation7], 1
    %1480 = vsyncpa [#allocation10], 1
    %1481 = vsyncpa [#allocation5], 1

</llo_original>
